<compile_context>
chip_gen: v7x
topology: tpu7x:2x2x1
jax: 0.10.0
libtpu: 0.0.40
codegen_flags: <defaults>
</compile_context>

<pallas_src>
import functools

import jax
import jax.numpy as jnp
from jax.experimental import pallas as pl
from jax.experimental.pallas import tpu as pltpu

PAD_TOKEN_ID = 0
LN_EPS = 1e-12                      # BERT layer-norm epsilon
VMEM_LIMIT = 32 * 1024 * 1024       # safe scoped limit on v5e/v6e/v7x
# Preferred tile sizes (fit comfortably in v7x's 64 MiB VMEM with bf16 and
# double buffering; also fine on v5e/v6e). Shrink tm/tn for very large H.
TM, TN, TK = 256, 512, 512
ROW_TILE = 1024                     # rows per step for LayerNorm / head pooling


def _fit_tile(dim, preferred, align):
    """Largest tile <= preferred that divides `dim` and respects TPU tiling.

    Falls back to the full dimension (always legal) if no aligned divisor fits.
    """
    if dim <= preferred:
        return dim
    for t in range(preferred, align - 1, -1):
        if dim % t == 0 and t % align == 0:
            return t
    return dim


# ----------------------------- Pallas kernels -----------------------------

def _matmul_kernel(x_ref, w_ref, b_ref, o_ref, acc_ref, *, activation):
    """Tiled matmul with f32 accumulator; bias (+ optional GELU) fused into
    the last k-step epilogue."""
    @pl.when(pl.program_id(2) == 0)
    def _():
        acc_ref[...] = jnp.zeros_like(acc_ref)

    acc_ref[...] += jnp.dot(x_ref[...], w_ref[...],
                            preferred_element_type=jnp.float32)

    @pl.when(pl.program_id(2) == pl.num_programs(2) - 1)
    def _():
        y = acc_ref[...] + b_ref[...]                      # f32 + f32
        if activation == "gelu":
            # exact (erf-based) GELU in f32, matching HF BERT's default "gelu"
            y = 0.5 * y * (1.0 + jax.lax.erf(y * 0.7071067811865476))
        o_ref[...] = y.astype(o_ref.dtype)


def _ln_math(x, g, b):
    mean = jnp.mean(x, axis=-1, keepdims=True)
    var = jnp.mean(jnp.square(x - mean), axis=-1, keepdims=True)
    inv = jax.lax.rsqrt(var + LN_EPS)
    return (x - mean) * inv * g + b


def _layernorm_kernel(x_ref, g_ref, b_ref, o_ref):
    x = x_ref[...].astype(jnp.float32)                     # f32 statistics
    o_ref[...] = _ln_math(x, g_ref[...], b_ref[...]).astype(o_ref.dtype)


def _residual_layernorm_kernel(x_ref, r_ref, g_ref, b_ref, o_ref):
    # residual add fused into the LayerNorm kernel (saves a full HBM round trip)
    x = x_ref[...].astype(jnp.float32) + r_ref[...].astype(jnp.float32)
    o_ref[...] = _ln_math(x, g_ref[...], b_ref[...]).astype(o_ref.dtype)


def _attention_kernel(qkv_ref, bias_ref, o_ref, *, num_heads, scale):
    """One batch element per grid step; all heads handled inside (static loop),
    bf16 matmuls with f32 softmax statistics, lane-dense (S, H) output."""
    S = qkv_ref.shape[0]
    H = qkv_ref.shape[1] // 3
    DH = H // num_heads

    qkv = qkv_ref[...]                                     # (S, 3H) bf16
    bias = bias_ref[...]                                   # (1, S) f32 key-mask

    ctx_heads = []
    for h in range(num_heads):                             # static, unrolled
        q = qkv[:, h * DH:(h + 1) * DH]
        k = qkv[:, H + h * DH:H + (h + 1) * DH]
        v = qkv[:, 2 * H + h * DH:2 * H + (h + 1) * DH]
        # contract on the feature axis of both operands -> no materialized k.T
        scores = jax.lax.dot_general(
            q, k, (((1,), (1,)), ((), ())),
            preferred_element_type=jnp.float32) * scale     # (S, S) f32
        scores = scores + bias                              # mask along keys
        m = jnp.max(scores, axis=-1, keepdims=True)
        p = jnp.exp(scores - m)
        denom = jnp.sum(p, axis=-1, keepdims=True)
        probs = (p * pl.reciprocal(denom, approx=True)).astype(qkv.dtype)
        ctx_heads.append(jnp.dot(probs, v,
                                 preferred_element_type=jnp.float32))
    ctx = jnp.concatenate(ctx_heads, axis=-1)               # (S, H), lane dense
    o_ref[...] = ctx.astype(o_ref.dtype)


def _head_kernel(h_ref, w_ref, b_ref, o_ref, max_ref):
    """Sequence-tiled max pooling with a running (B, H) max in VMEM scratch;
    decision matmul + softmax only on the final step."""
    s = pl.program_id(0)

    @pl.when(s == 0)
    def _():
        max_ref[...] = jnp.full_like(max_ref, -jnp.inf)

    blk = h_ref[...].astype(jnp.float32)                    # (B, ts, H)
    max_ref[...] = jnp.maximum(max_ref[...], jnp.max(blk, axis=1))

    @pl.when(s == pl.num_programs(0) - 1)
    def _():
        logits = jnp.dot(max_ref[...], w_ref[...],
                         preferred_element_type=jnp.float32) + b_ref[...]
        m = jnp.max(logits, axis=-1, keepdims=True)
        e = jnp.exp(logits - m)
        # exact divide here so the class probabilities sum to 1 tightly
        o_ref[...] = e / jnp.sum(e, axis=-1, keepdims=True)


# ------------------------------ wrappers -----------------------------------

def linear(x, w, b, *, activation=None, out_dtype=jnp.bfloat16):
    """x: (M, K) bf16, w: (K, N) bf16, b: (N,) f32 -> (M, N) out_dtype."""
    M, K = x.shape
    N = w.shape[1]
    tm = _fit_tile(M, TM, 8)
    tn = _fit_tile(N, TN, 128)
    tk = _fit_tile(K, TK, 128)
    grid = (M // tm, N // tn, K // tk)
    return pl.pallas_call(
        functools.partial(_matmul_kernel, activation=activation),
        out_shape=jax.ShapeDtypeStruct((M, N), out_dtype),
        grid=grid,
        in_specs=[pl.BlockSpec((tm, tk), lambda i, j, k: (i, k)),
                  pl.BlockSpec((tk, tn), lambda i, j, k: (k, j)),
                  pl.BlockSpec((1, tn), lambda i, j, k: (0, j))],
        out_specs=pl.BlockSpec((tm, tn), lambda i, j, k: (i, j)),
        scratch_shapes=[pltpu.VMEM((tm, tn), jnp.float32)],
        compiler_params=pltpu.CompilerParams(
            dimension_semantics=("parallel", "parallel", "arbitrary"),
            vmem_limit_bytes=VMEM_LIMIT),
    )(x, w, b.reshape(1, N))


def layernorm(x, gamma, beta, *, out_dtype=jnp.bfloat16):
    """x: (M, H); gamma/beta: (H,) f32 -> (M, H) out_dtype, tiled over rows."""
    M, H = x.shape
    tm = _fit_tile(M, ROW_TILE, 8)
    return pl.pallas_call(
        _layernorm_kernel,
        out_shape=jax.ShapeDtypeStruct((M, H), out_dtype),
        grid=(M // tm,),
        in_specs=[pl.BlockSpec((tm, H), lambda i: (i, 0)),
                  pl.BlockSpec((1, H), lambda i: (0, 0)),
                  pl.BlockSpec((1, H), lambda i: (0, 0))],
        out_specs=pl.BlockSpec((tm, H), lambda i: (i, 0)),
        compiler_params=pltpu.CompilerParams(
            dimension_semantics=("parallel",), vmem_limit_bytes=VMEM_LIMIT),
    )(x, gamma.reshape(1, H), beta.reshape(1, H))


def residual_layernorm(x, res, gamma, beta, *, out_dtype=jnp.bfloat16):
    """LayerNorm(x + res): both (M, H); gamma/beta (H,) f32."""
    M, H = x.shape
    tm = _fit_tile(M, ROW_TILE, 8)
    return pl.pallas_call(
        _residual_layernorm_kernel,
        out_shape=jax.ShapeDtypeStruct((M, H), out_dtype),
        grid=(M // tm,),
        in_specs=[pl.BlockSpec((tm, H), lambda i: (i, 0)),
                  pl.BlockSpec((tm, H), lambda i: (i, 0)),
                  pl.BlockSpec((1, H), lambda i: (0, 0)),
                  pl.BlockSpec((1, H), lambda i: (0, 0))],
        out_specs=pl.BlockSpec((tm, H), lambda i: (i, 0)),
        compiler_params=pltpu.CompilerParams(
            dimension_semantics=("parallel",), vmem_limit_bytes=VMEM_LIMIT),
    )(x, res, gamma.reshape(1, H), beta.reshape(1, H))


def attention(qkv, mask_bias, *, num_heads):
    """qkv: (B, S, 3H) bf16 (fused q|k|v); mask_bias: (B, 1, S) f32 -> (B, S, H)."""
    B, S, H3 = qkv.shape
    H = H3 // 3
    DH = H // num_heads
    scale = 1.0 / (DH ** 0.5)
    return pl.pallas_call(
        functools.partial(_attention_kernel, num_heads=num_heads, scale=scale),
        out_shape=jax.ShapeDtypeStruct((B, S, H), qkv.dtype),
        grid=(B,),
        in_specs=[pl.BlockSpec((None, S, H3), lambda b: (b, 0, 0)),
                  pl.BlockSpec((None, 1, S), lambda b: (b, 0, 0))],
        out_specs=pl.BlockSpec((None, S, H), lambda b: (b, 0, 0)),
        compiler_params=pltpu.CompilerParams(
            dimension_semantics=("parallel",), vmem_limit_bytes=VMEM_LIMIT),
    )(qkv, mask_bias)


def classifier_head(hidden, w_dec, b_dec):
    """hidden: (B, S, H) bf16; w_dec: (H, C) f32; b_dec: (C,) f32 -> (B, C) probs."""
    B, S, H = hidden.shape
    C = w_dec.shape[1]
    ts = _fit_tile(S, ROW_TILE, 8)
    return pl.pallas_call(
        _head_kernel,
        out_shape=jax.ShapeDtypeStruct((B, C), jnp.float32),
        grid=(S // ts,),
        in_specs=[pl.BlockSpec((B, ts, H), lambda s: (0, s, 0)),
                  pl.BlockSpec((H, C), lambda s: (0, 0)),
                  pl.BlockSpec((1, C), lambda s: (0, 0))],
        out_specs=pl.BlockSpec((B, C), lambda s: (0, 0)),
        scratch_shapes=[pltpu.VMEM((B, H), jnp.float32)],
        compiler_params=pltpu.CompilerParams(
            dimension_semantics=("arbitrary",), vmem_limit_bytes=VMEM_LIMIT),
    )(hidden, w_dec, b_dec.reshape(1, C))


# ------------------------------ model glue ----------------------------------

def init_params(key, vocab, max_pos, H, NH, I, L, C):
    def nrm(k, shape, dtype=jnp.bfloat16):
        return (jax.random.normal(k, shape, jnp.float32) * 0.02).astype(dtype)

    keys = iter(jax.random.split(key, 8 + 8 * L))
    p = {
        "word_emb": nrm(next(keys), (vocab, H), jnp.float32),
        "pos_emb": nrm(next(keys), (max_pos, H), jnp.float32),
        "type_emb": nrm(next(keys), (2, H), jnp.float32),
        "emb_ln_g": jnp.ones((H,), jnp.float32),
        "emb_ln_b": jnp.zeros((H,), jnp.float32),
        "dec_w": nrm(next(keys), (H, C), jnp.float32),
        "dec_b": jnp.zeros((C,), jnp.float32),
        "layers": [],
    }
    for _ in range(L):
        p["layers"].append({
            # fused Q|K|V projection weight (H, 3H), bf16 for the MXU
            "wqkv": nrm(next(keys), (H, 3 * H)),
            "bqkv": jnp.zeros((3 * H,), jnp.float32),
            "wo": nrm(next(keys), (H, H)), "bo": jnp.zeros((H,), jnp.float32),
            "ln1_g": jnp.ones((H,), jnp.float32), "ln1_b": jnp.zeros((H,), jnp.float32),
            "wi": nrm(next(keys), (H, I)), "bi": jnp.zeros((I,), jnp.float32),
            "wf": nrm(next(keys), (I, H)), "bf": jnp.zeros((H,), jnp.float32),
            "ln2_g": jnp.ones((H,), jnp.float32), "ln2_b": jnp.zeros((H,), jnp.float32),
        })
    return p


def forward(params, x, *, num_heads):
    B, S = x.shape
    H = params["word_emb"].shape[1]

    # attention mask from token ids (pad positions masked inside BERT)
    mask = (x != PAD_TOKEN_ID).astype(jnp.float32)              # (B, S)
    mask_bias = ((1.0 - mask) * -1e9).reshape(B, 1, S)          # additive bias

    # embeddings: gather + adds left to XLA (no clean tiled-BlockSpec gather);
    # the LayerNorm itself is a Pallas kernel.
    # TODO(synk): embedding gather could use a manual-DMA gather kernel.
    emb = (params["word_emb"][x]
           + params["pos_emb"][jnp.arange(S)][None, :, :]
           + params["type_emb"][0][None, None, :])              # (B, S, H) f32
    h = layernorm(emb.reshape(B * S, H),
                  params["emb_ln_g"], params["emb_ln_b"])       # (B*S, H) bf16

    for lp in params["layers"]:
        # fused QKV projection: one matmul, one read of h
        qkv = linear(h, lp["wqkv"], lp["bqkv"])                 # (B*S, 3H) bf16
        ctx = attention(qkv.reshape(B, S, 3 * H), mask_bias,
                        num_heads=num_heads)                    # (B, S, H) bf16
        attn_out = linear(ctx.reshape(B * S, H), lp["wo"], lp["bo"])
        h = residual_layernorm(attn_out, h, lp["ln1_g"], lp["ln1_b"])
        # feed-forward (GELU fused into the matmul epilogue)
        ff = linear(h, lp["wi"], lp["bi"], activation="gelu")
        ff_out = linear(ff, lp["wf"], lp["bf"])
        h = residual_layernorm(ff_out, h, lp["ln2_g"], lp["ln2_b"])

    last_hidden = h.reshape(B, S, H)                            # output[0]
    # max over seq dim, decision linear, softmax over classes — fused kernel
    return classifier_head(last_hidden, params["dec_w"], params["dec_b"])


# --------------------------------- main --------------------------------------

if __name__ == "__main__":
    B, S = 2, 8
    VOCAB, MAX_POS = 64, 32
    H, NH, I, L, C = 32, 4, 64, 2, 4

    key = jax.random.PRNGKey(0)
    pkey, xkey = jax.random.split(key)
    params = init_params(pkey, VOCAB, MAX_POS, H, NH, I, L, C)

    x = jax.random.randint(xkey, (B, S), 1, VOCAB, dtype=jnp.int32)
    x = x.at[0, 5:].set(PAD_TOKEN_ID)   # padded tail exercises the attention mask

    fwd = jax.jit(functools.partial(forward, num_heads=NH))
    probs = jax.block_until_ready(fwd(params, x))

    assert probs.shape == (B, C)
    assert jnp.allclose(jnp.sum(probs, axis=-1), 1.0, atol=1e-5)
    print("KERNEL_OK")
</pallas_src>

<mosaic_0001>
module attributes {stable_mosaic.version = 11 : i64} {
  func.func @_layernorm_kernel(%arg0: i32, %arg1: memref<16x32xf32, #tpu.memory_space<vmem>>, %arg2: memref<1x32xf32, #tpu.memory_space<vmem>>, %arg3: memref<1x32xf32, #tpu.memory_space<vmem>>, %arg4: memref<16x32xbf16, #tpu.memory_space<vmem>>) attributes {dimension_semantics = [#tpu.dimension_semantics<parallel>], iteration_bounds = array<i64: 1>, scalar_prefetch = 0 : i64, scratch_operands = 0 : i64, tpu.core_type = #tpu.core_type<tc>, window_params = [{transform_indices = @transform_0, window_bounds = array<i64: 16, 32>}, {pipeline_mode = #tpu.pipeline_mode<synchronous>, transform_indices = @transform_1, window_bounds = array<i64: 1, 32>}, {pipeline_mode = #tpu.pipeline_mode<synchronous>, transform_indices = @transform_2, window_bounds = array<i64: 1, 32>}, {transform_indices = @transform_3, window_bounds = array<i64: 16, 32>}]} {
    %c0 = arith.constant 0 : index
    %c0_0 = arith.constant 0 : index
    %0 = vector.load %arg1[%c0, %c0_0] : memref<16x32xf32, #tpu.memory_space<vmem>>, vector<16x32xf32>
    %c0_1 = arith.constant 0 : index
    %c0_2 = arith.constant 0 : index
    %1 = vector.load %arg2[%c0_1, %c0_2] : memref<1x32xf32, #tpu.memory_space<vmem>>, vector<1x32xf32>
    %c0_3 = arith.constant 0 : index
    %c0_4 = arith.constant 0 : index
    %2 = vector.load %arg3[%c0_3, %c0_4] : memref<1x32xf32, #tpu.memory_space<vmem>>, vector<1x32xf32>
    %cst = arith.constant dense<0.000000e+00> : vector<16xf32>
    %3 = vector.multi_reduction <add>, %0, %cst [1] : vector<16x32xf32> to vector<16xf32>
    %4 = vector.shape_cast %3 : vector<16xf32> to vector<16x1xf32>
    %cst_5 = arith.constant 3.200000e+01 : f32
    %5 = vector.broadcast %cst_5 : f32 to vector<16x1xf32>
    %6 = arith.divf %4, %5 : vector<16x1xf32>
    %7 = vector.broadcast %6 : vector<16x1xf32> to vector<16x32xf32>
    %8 = arith.subf %0, %7 : vector<16x32xf32>
    %9 = arith.mulf %8, %8 : vector<16x32xf32>
    %cst_6 = arith.constant dense<0.000000e+00> : vector<16xf32>
    %10 = vector.multi_reduction <add>, %9, %cst_6 [1] : vector<16x32xf32> to vector<16xf32>
    %11 = vector.shape_cast %10 : vector<16xf32> to vector<16x1xf32>
    %cst_7 = arith.constant 3.200000e+01 : f32
    %12 = vector.broadcast %cst_7 : f32 to vector<16x1xf32>
    %13 = arith.divf %11, %12 : vector<16x1xf32>
    %cst_8 = arith.constant 9.99999996E-13 : f32
    %14 = vector.broadcast %cst_8 : f32 to vector<16x1xf32>
    %15 = arith.addf %13, %14 : vector<16x1xf32>
    %16 = math.rsqrt %15 : vector<16x1xf32>
    %17 = vector.broadcast %6 : vector<16x1xf32> to vector<16x32xf32>
    %18 = arith.subf %0, %17 : vector<16x32xf32>
    %19 = vector.broadcast %16 : vector<16x1xf32> to vector<16x32xf32>
    %20 = arith.mulf %18, %19 : vector<16x32xf32>
    %21 = vector.broadcast %1 : vector<1x32xf32> to vector<16x32xf32>
    %22 = arith.mulf %20, %21 : vector<16x32xf32>
    %23 = vector.broadcast %2 : vector<1x32xf32> to vector<16x32xf32>
    %24 = arith.addf %22, %23 : vector<16x32xf32>
    %25 = arith.truncf %24 : vector<16x32xf32> to vector<16x32xbf16>
    %c0_9 = arith.constant 0 : index
    %c0_10 = arith.constant 0 : index
    %26 = vector.load %arg4[%c0_9, %c0_10] : memref<16x32xbf16, #tpu.memory_space<vmem>>, vector<16x32xbf16>
    tpu.vector_store %arg4[%c0_9, %c0_10], %25 {strides = array<i32>} : memref<16x32xbf16, #tpu.memory_space<vmem>>, vector<16x32xbf16>,
    return
  }
  func.func @transform_0(%arg0: i32) -> (i32, i32) {
    %c0_i32 = arith.constant 0 : i32
    %c0_i32_0 = arith.constant 0 : i32
    return %arg0, %c0_i32 : i32, i32
  }
  func.func @transform_1(%arg0: i32) -> (i32, i32) {
    %c0_i32 = arith.constant 0 : i32
    %c0_i32_0 = arith.constant 0 : i32
    %c0_i32_1 = arith.constant 0 : i32
    return %c0_i32, %c0_i32_0 : i32, i32
  }
  func.func @transform_2(%arg0: i32) -> (i32, i32) {
    %c0_i32 = arith.constant 0 : i32
    %c0_i32_0 = arith.constant 0 : i32
    %c0_i32_1 = arith.constant 0 : i32
    return %c0_i32, %c0_i32_0 : i32, i32
  }
  func.func @transform_3(%arg0: i32) -> (i32, i32) {
    %c0_i32 = arith.constant 0 : i32
    %c0_i32_0 = arith.constant 0 : i32
    return %arg0, %c0_i32 : i32, i32
  }
}

module attributes {stable_mosaic.version = 11 : i64} {
  func.func @_matmul_kernel(%arg0: i32, %arg1: i32, %arg2: i32, %arg3: memref<16x32xbf16, #tpu.memory_space<vmem>>, %arg4: memref<32x96xbf16, #tpu.memory_space<vmem>>, %arg5: memref<1x96xf32, #tpu.memory_space<vmem>>, %arg6: memref<16x96xbf16, #tpu.memory_space<vmem>>, %arg7: memref<16x96xf32, #tpu.memory_space<vmem>>) attributes {dimension_semantics = [#tpu.dimension_semantics<parallel>, #tpu.dimension_semantics<parallel>, #tpu.dimension_semantics<arbitrary>], iteration_bounds = array<i64: 1, 1, 1>, scalar_prefetch = 0 : i64, scratch_operands = 1 : i64, tpu.core_type = #tpu.core_type<tc>, window_params = [{transform_indices = @transform_0, window_bounds = array<i64: 16, 32>}, {transform_indices = @transform_1, window_bounds = array<i64: 32, 96>}, {transform_indices = @transform_2, window_bounds = array<i64: 1, 96>}, {transform_indices = @transform_3, window_bounds = array<i64: 16, 96>}]} {
    %c0_i32 = arith.constant 0 : i32
    %0 = arith.cmpi eq, %arg2, %c0_i32 : i32
    %1 = arith.extui %0 : i1 to i32
    %c0_i32_0 = arith.constant 0 : i32
    %2 = arith.cmpi ne, %1, %c0_i32_0 : i32
    scf.if %2 {
      %cst_10 = arith.constant 0.000000e+00 : f32
      %12 = vector.broadcast %cst_10 : f32 to vector<16x96xf32>
      %c0_11 = arith.constant 0 : index
      %c0_12 = arith.constant 0 : index
      %13 = vector.load %arg7[%c0_11, %c0_12] : memref<16x96xf32, #tpu.memory_space<vmem>>, vector<16x96xf32>
      tpu.vector_store %arg7[%c0_11, %c0_12], %12 {strides = array<i32>} : memref<16x96xf32, #tpu.memory_space<vmem>>, vector<16x96xf32>,
    } else {
    }
    %c0 = arith.constant 0 : index
    %c0_1 = arith.constant 0 : index
    %3 = vector.load %arg7[%c0, %c0_1] : memref<16x96xf32, #tpu.memory_space<vmem>>, vector<16x96xf32>
    %c0_2 = arith.constant 0 : index
    %c0_3 = arith.constant 0 : index
    %4 = vector.load %arg3[%c0_2, %c0_3] : memref<16x32xbf16, #tpu.memory_space<vmem>>, vector<16x32xbf16>
    %c0_4 = arith.constant 0 : index
    %c0_5 = arith.constant 0 : index
    %5 = vector.load %arg4[%c0_4, %c0_5] : memref<32x96xbf16, #tpu.memory_space<vmem>>, vector<32x96xbf16>
    %cst = arith.constant dense<0.000000e+00> : vector<16x96xf32>
    %6 = tpu.matmul %4, %5, %cst {dimension_numbers = #tpu.dot_dimension_numbers<[1], [0], [0], [1], [0, 0, 1, 1], [], []>} : vector<16x32xbf16>, vector<32x96xbf16>, vector<16x96xf32> -> vector<16x96xf32>
    %7 = arith.addf %3, %6 : vector<16x96xf32>
    %c0_6 = arith.constant 0 : index
    %c0_7 = arith.constant 0 : index
    %8 = vector.load %arg7[%c0_6, %c0_7] : memref<16x96xf32, #tpu.memory_space<vmem>>, vector<16x96xf32>
    tpu.vector_store %arg7[%c0_6, %c0_7], %7 {strides = array<i32>} : memref<16x96xf32, #tpu.memory_space<vmem>>, vector<16x96xf32>,
    %c0_i32_8 = arith.constant 0 : i32
    %9 = arith.cmpi eq, %arg2, %c0_i32_8 : i32
    %10 = arith.extui %9 : i1 to i32
    %c0_i32_9 = arith.constant 0 : i32
    %11 = arith.cmpi ne, %10, %c0_i32_9 : i32
    scf.if %11 {
      %c0_10 = arith.constant 0 : index
      %c0_11 = arith.constant 0 : index
      %12 = vector.load %arg7[%c0_10, %c0_11] : memref<16x96xf32, #tpu.memory_space<vmem>>, vector<16x96xf32>
      %c0_12 = arith.constant 0 : index
      %c0_13 = arith.constant 0 : index
      %13 = vector.load %arg5[%c0_12, %c0_13] : memref<1x96xf32, #tpu.memory_space<vmem>>, vector<1x96xf32>
      %14 = vector.broadcast %13 : vector<1x96xf32> to vector<16x96xf32>
      %15 = arith.addf %12, %14 : vector<16x96xf32>
      %16 = arith.truncf %15 : vector<16x96xf32> to vector<16x96xbf16>
      %c0_14 = arith.constant 0 : index
      %c0_15 = arith.constant 0 : index
      %17 = vector.load %arg6[%c0_14, %c0_15] : memref<16x96xbf16, #tpu.memory_space<vmem>>, vector<16x96xbf16>
      tpu.vector_store %arg6[%c0_14, %c0_15], %16 {strides = array<i32>} : memref<16x96xbf16, #tpu.memory_space<vmem>>, vector<16x96xbf16>,
    } else {
    }
    return
  }
  func.func @transform_0(%arg0: i32, %arg1: i32, %arg2: i32) -> (i32, i32) {
    %c0_i32 = arith.constant 0 : i32
    return %arg0, %arg2 : i32, i32
  }
  func.func @transform_1(%arg0: i32, %arg1: i32, %arg2: i32) -> (i32, i32) {
    %c0_i32 = arith.constant 0 : i32
    return %arg2, %arg1 : i32, i32
  }
  func.func @transform_2(%arg0: i32, %arg1: i32, %arg2: i32) -> (i32, i32) {
    %c0_i32 = arith.constant 0 : i32
    %c0_i32_0 = arith.constant 0 : i32
    return %c0_i32, %arg1 : i32, i32
  }
  func.func @transform_3(%arg0: i32, %arg1: i32, %arg2: i32) -> (i32, i32) {
    %c0_i32 = arith.constant 0 : i32
    return %arg0, %arg1 : i32, i32
  }
}

module attributes {stable_mosaic.version = 11 : i64} {
  func.func @_matmul_kernel(%arg0: i32, %arg1: i32, %arg2: i32, %arg3: memref<16x32xbf16, #tpu.memory_space<vmem>>, %arg4: memref<32x32xbf16, #tpu.memory_space<vmem>>, %arg5: memref<1x32xf32, #tpu.memory_space<vmem>>, %arg6: memref<16x32xbf16, #tpu.memory_space<vmem>>, %arg7: memref<16x32xf32, #tpu.memory_space<vmem>>) attributes {dimension_semantics = [#tpu.dimension_semantics<parallel>, #tpu.dimension_semantics<parallel>, #tpu.dimension_semantics<arbitrary>], iteration_bounds = array<i64: 1, 1, 1>, scalar_prefetch = 0 : i64, scratch_operands = 1 : i64, tpu.core_type = #tpu.core_type<tc>, window_params = [{transform_indices = @transform_0, window_bounds = array<i64: 16, 32>}, {transform_indices = @transform_1, window_bounds = array<i64: 32, 32>}, {transform_indices = @transform_2, window_bounds = array<i64: 1, 32>}, {transform_indices = @transform_3, window_bounds = array<i64: 16, 32>}]} {
    %c0_i32 = arith.constant 0 : i32
    %0 = arith.cmpi eq, %arg2, %c0_i32 : i32
    %1 = arith.extui %0 : i1 to i32
    %c0_i32_0 = arith.constant 0 : i32
    %2 = arith.cmpi ne, %1, %c0_i32_0 : i32
    scf.if %2 {
      %cst_10 = arith.constant 0.000000e+00 : f32
      %12 = vector.broadcast %cst_10 : f32 to vector<16x32xf32>
      %c0_11 = arith.constant 0 : index
      %c0_12 = arith.constant 0 : index
      %13 = vector.load %arg7[%c0_11, %c0_12] : memref<16x32xf32, #tpu.memory_space<vmem>>, vector<16x32xf32>
      tpu.vector_store %arg7[%c0_11, %c0_12], %12 {strides = array<i32>} : memref<16x32xf32, #tpu.memory_space<vmem>>, vector<16x32xf32>,
    } else {
    }
    %c0 = arith.constant 0 : index
    %c0_1 = arith.constant 0 : index
    %3 = vector.load %arg7[%c0, %c0_1] : memref<16x32xf32, #tpu.memory_space<vmem>>, vector<16x32xf32>
    %c0_2 = arith.constant 0 : index
    %c0_3 = arith.constant 0 : index
    %4 = vector.load %arg3[%c0_2, %c0_3] : memref<16x32xbf16, #tpu.memory_space<vmem>>, vector<16x32xbf16>
    %c0_4 = arith.constant 0 : index
    %c0_5 = arith.constant 0 : index
    %5 = vector.load %arg4[%c0_4, %c0_5] : memref<32x32xbf16, #tpu.memory_space<vmem>>, vector<32x32xbf16>
    %cst = arith.constant dense<0.000000e+00> : vector<16x32xf32>
    %6 = tpu.matmul %4, %5, %cst {dimension_numbers = #tpu.dot_dimension_numbers<[1], [0], [0], [1], [0, 0, 1, 1], [], []>} : vector<16x32xbf16>, vector<32x32xbf16>, vector<16x32xf32> -> vector<16x32xf32>
    %7 = arith.addf %3, %6 : vector<16x32xf32>
    %c0_6 = arith.constant 0 : index
    %c0_7 = arith.constant 0 : index
    %8 = vector.load %arg7[%c0_6, %c0_7] : memref<16x32xf32, #tpu.memory_space<vmem>>, vector<16x32xf32>
    tpu.vector_store %arg7[%c0_6, %c0_7], %7 {strides = array<i32>} : memref<16x32xf32, #tpu.memory_space<vmem>>, vector<16x32xf32>,
    %c0_i32_8 = arith.constant 0 : i32
    %9 = arith.cmpi eq, %arg2, %c0_i32_8 : i32
    %10 = arith.extui %9 : i1 to i32
    %c0_i32_9 = arith.constant 0 : i32
    %11 = arith.cmpi ne, %10, %c0_i32_9 : i32
    scf.if %11 {
      %c0_10 = arith.constant 0 : index
      %c0_11 = arith.constant 0 : index
      %12 = vector.load %arg7[%c0_10, %c0_11] : memref<16x32xf32, #tpu.memory_space<vmem>>, vector<16x32xf32>
      %c0_12 = arith.constant 0 : index
      %c0_13 = arith.constant 0 : index
      %13 = vector.load %arg5[%c0_12, %c0_13] : memref<1x32xf32, #tpu.memory_space<vmem>>, vector<1x32xf32>
      %14 = vector.broadcast %13 : vector<1x32xf32> to vector<16x32xf32>
      %15 = arith.addf %12, %14 : vector<16x32xf32>
      %16 = arith.truncf %15 : vector<16x32xf32> to vector<16x32xbf16>
      %c0_14 = arith.constant 0 : index
      %c0_15 = arith.constant 0 : index
      %17 = vector.load %arg6[%c0_14, %c0_15] : memref<16x32xbf16, #tpu.memory_space<vmem>>, vector<16x32xbf16>
      tpu.vector_store %arg6[%c0_14, %c0_15], %16 {strides = array<i32>} : memref<16x32xbf16, #tpu.memory_space<vmem>>, vector<16x32xbf16>,
    } else {
    }
    return
  }
  func.func @transform_0(%arg0: i32, %arg1: i32, %arg2: i32) -> (i32, i32) {
    %c0_i32 = arith.constant 0 : i32
    return %arg0, %arg2 : i32, i32
  }
  func.func @transform_1(%arg0: i32, %arg1: i32, %arg2: i32) -> (i32, i32) {
    %c0_i32 = arith.constant 0 : i32
    return %arg2, %arg1 : i32, i32
  }
  func.func @transform_2(%arg0: i32, %arg1: i32, %arg2: i32) -> (i32, i32) {
    %c0_i32 = arith.constant 0 : i32
    %c0_i32_0 = arith.constant 0 : i32
    return %c0_i32, %arg1 : i32, i32
  }
  func.func @transform_3(%arg0: i32, %arg1: i32, %arg2: i32) -> (i32, i32) {
    %c0_i32 = arith.constant 0 : i32
    return %arg0, %arg1 : i32, i32
  }
}

module attributes {stable_mosaic.version = 11 : i64} {
  func.func @_attention_kernel(%arg0: i32, %arg1: memref<1x8x96xbf16, #tpu.memory_space<vmem>>, %arg2: memref<1x1x8xf32, #tpu.memory_space<vmem>>, %arg3: memref<1x8x32xbf16, #tpu.memory_space<vmem>>) attributes {dimension_semantics = [#tpu.dimension_semantics<parallel>], iteration_bounds = array<i64: 2>, scalar_prefetch = 0 : i64, scratch_operands = 0 : i64, tpu.core_type = #tpu.core_type<tc>, window_params = [{transform_indices = @transform_0, window_bounds = array<i64: 1, 8, 96>}, {transform_indices = @transform_1, window_bounds = array<i64: 1, 1, 8>}, {transform_indices = @transform_2, window_bounds = array<i64: 1, 8, 32>}]} {
    %c0 = arith.constant 0 : index
    %c0_0 = arith.constant 0 : index
    %c0_1 = arith.constant 0 : index
    %0 = vector.load %arg1[%c0, %c0_0, %c0_1] : memref<1x8x96xbf16, #tpu.memory_space<vmem>>, vector<1x8x96xbf16>
    %1 = vector.shape_cast %0 : vector<1x8x96xbf16> to vector<8x96xbf16>
    %c0_2 = arith.constant 0 : index
    %c0_3 = arith.constant 0 : index
    %c0_4 = arith.constant 0 : index
    %2 = vector.load %arg2[%c0_2, %c0_3, %c0_4] : memref<1x1x8xf32, #tpu.memory_space<vmem>>, vector<1x1x8xf32>
    %3 = vector.shape_cast %2 : vector<1x1x8xf32> to vector<1x8xf32>
    %4 = vector.extract_strided_slice %1 {offsets = [0, 0], sizes = [8, 8], strides = [1, 1]} : vector<8x96xbf16> to vector<8x8xbf16>
    %5 = vector.extract_strided_slice %1 {offsets = [0, 32], sizes = [8, 8], strides = [1, 1]} : vector<8x96xbf16> to vector<8x8xbf16>
    %6 = vector.extract_strided_slice %1 {offsets = [0, 64], sizes = [8, 8], strides = [1, 1]} : vector<8x96xbf16> to vector<8x8xbf16>
    %cst = arith.constant dense<0.000000e+00> : vector<8x8xf32>
    %7 = tpu.matmul %4, %5, %cst {dimension_numbers = #tpu.dot_dimension_numbers<[1], [1], [0], [0], [0, 0, 1, 0], [], []>} : vector<8x8xbf16>, vector<8x8xbf16>, vector<8x8xf32> -> vector<8x8xf32>
    %cst_5 = arith.constant 0.353553385 : f32
    %8 = vector.broadcast %cst_5 : f32 to vector<8x8xf32>
    %9 = arith.mulf %7, %8 : vector<8x8xf32>
    %10 = vector.broadcast %3 : vector<1x8xf32> to vector<8x8xf32>
    %11 = arith.addf %9, %10 : vector<8x8xf32>
    %cst_6 = arith.constant dense<0xFF800000> : vector<8xf32>
    %12 = vector.multi_reduction <maximumf>, %11, %cst_6 [1] : vector<8x8xf32> to vector<8xf32>
    %13 = vector.shape_cast %12 : vector<8xf32> to vector<8x1xf32>
    %14 = vector.broadcast %13 : vector<8x1xf32> to vector<8x8xf32>
    %15 = arith.subf %11, %14 : vector<8x8xf32>
    %16 = math.exp %15 : vector<8x8xf32>
    %cst_7 = arith.constant dense<0.000000e+00> : vector<8xf32>
    %17 = vector.multi_reduction <add>, %16, %cst_7 [1] : vector<8x8xf32> to vector<8xf32>
    %18 = vector.shape_cast %17 : vector<8xf32> to vector<8x1xf32>
    %19 = tpu.reciprocal %18 {approx = true} : vector<8x1xf32> -> vector<8x1xf32>
    %20 = vector.broadcast %19 : vector<8x1xf32> to vector<8x8xf32>
    %21 = arith.mulf %16, %20 : vector<8x8xf32>
    %22 = arith.truncf %21 : vector<8x8xf32> to vector<8x8xbf16>
    %cst_8 = arith.constant dense<0.000000e+00> : vector<8x8xf32>
    %23 = tpu.matmul %22, %6, %cst_8 {dimension_numbers = #tpu.dot_dimension_numbers<[1], [0], [0], [1], [0, 0, 1, 1], [], []>} : vector<8x8xbf16>, vector<8x8xbf16>, vector<8x8xf32> -> vector<8x8xf32>
    %24 = vector.extract_strided_slice %1 {offsets = [0, 8], sizes = [8, 8], strides = [1, 1]} : vector<8x96xbf16> to vector<8x8xbf16>
    %25 = vector.extract_strided_slice %1 {offsets = [0, 40], sizes = [8, 8], strides = [1, 1]} : vector<8x96xbf16> to vector<8x8xbf16>
    %26 = vector.extract_strided_slice %1 {offsets = [0, 72], sizes = [8, 8], strides = [1, 1]} : vector<8x96xbf16> to vector<8x8xbf16>
    %cst_9 = arith.constant dense<0.000000e+00> : vector<8x8xf32>
    %27 = tpu.matmul %24, %25, %cst_9 {dimension_numbers = #tpu.dot_dimension_numbers<[1], [1], [0], [0], [0, 0, 1, 0], [], []>} : vector<8x8xbf16>, vector<8x8xbf16>, vector<8x8xf32> -> vector<8x8xf32>
    %cst_10 = arith.constant 0.353553385 : f32
    %28 = vector.broadcast %cst_10 : f32 to vector<8x8xf32>
    %29 = arith.mulf %27, %28 : vector<8x8xf32>
    %30 = vector.broadcast %3 : vector<1x8xf32> to vector<8x8xf32>
    %31 = arith.addf %29, %30 : vector<8x8xf32>
    %cst_11 = arith.constant dense<0xFF800000> : vector<8xf32>
    %32 = vector.multi_reduction <maximumf>, %31, %cst_11 [1] : vector<8x8xf32> to vector<8xf32>
    %33 = vector.shape_cast %32 : vector<8xf32> to vector<8x1xf32>
    %34 = vector.broadcast %33 : vector<8x1xf32> to vector<8x8xf32>
    %35 = arith.subf %31, %34 : vector<8x8xf32>
    %36 = math.exp %35 : vector<8x8xf32>
    %cst_12 = arith.constant dense<0.000000e+00> : vector<8xf32>
    %37 = vector.multi_reduction <add>, %36, %cst_12 [1] : vector<8x8xf32> to vector<8xf32>
    %38 = vector.shape_cast %37 : vector<8xf32> to vector<8x1xf32>
    %39 = tpu.reciprocal %38 {approx = true} : vector<8x1xf32> -> vector<8x1xf32>
    %40 = vector.broadcast %39 : vector<8x1xf32> to vector<8x8xf32>
    %41 = arith.mulf %36, %40 : vector<8x8xf32>
    %42 = arith.truncf %41 : vector<8x8xf32> to vector<8x8xbf16>
    %cst_13 = arith.constant dense<0.000000e+00> : vector<8x8xf32>
    %43 = tpu.matmul %42, %26, %cst_13 {dimension_numbers = #tpu.dot_dimension_numbers<[1], [0], [0], [1], [0, 0, 1, 1], [], []>} : vector<8x8xbf16>, vector<8x8xbf16>, vector<8x8xf32> -> vector<8x8xf32>
    %44 = vector.extract_strided_slice %1 {offsets = [0, 16], sizes = [8, 8], strides = [1, 1]} : vector<8x96xbf16> to vector<8x8xbf16>
    %45 = vector.extract_strided_slice %1 {offsets = [0, 48], sizes = [8, 8], strides = [1, 1]} : vector<8x96xbf16> to vector<8x8xbf16>
    %46 = vector.extract_strided_slice %1 {offsets = [0, 80], sizes = [8, 8], strides = [1, 1]} : vector<8x96xbf16> to vector<8x8xbf16>
    %cst_14 = arith.constant dense<0.000000e+00> : vector<8x8xf32>
    %47 = tpu.matmul %44, %45, %cst_14 {dimension_numbers = #tpu.dot_dimension_numbers<[1], [1], [0], [0], [0, 0, 1, 0], [], []>} : vector<8x8xbf16>, vector<8x8xbf16>, vector<8x8xf32> -> vector<8x8xf32>
    %cst_15 = arith.constant 0.353553385 : f32
    %48 = vector.broadcast %cst_15 : f32 to vector<8x8xf32>
    %49 = arith.mulf %47, %48 : vector<8x8xf32>
    %50 = vector.broadcast %3 : vector<1x8xf32> to vector<8x8xf32>
    %51 = arith.addf %49, %50 : vector<8x8xf32>
    %cst_16 = arith.constant dense<0xFF800000> : vector<8xf32>
    %52 = vector.multi_reduction <maximumf>, %51, %cst_16 [1] : vector<8x8xf32> to vector<8xf32>
    %53 = vector.shape_cast %52 : vector<8xf32> to vector<8x1xf32>
    %54 = vector.broadcast %53 : vector<8x1xf32> to vector<8x8xf32>
    %55 = arith.subf %51, %54 : vector<8x8xf32>
    %56 = math.exp %55 : vector<8x8xf32>
    %cst_17 = arith.constant dense<0.000000e+00> : vector<8xf32>
    %57 = vector.multi_reduction <add>, %56, %cst_17 [1] : vector<8x8xf32> to vector<8xf32>
    %58 = vector.shape_cast %57 : vector<8xf32> to vector<8x1xf32>
    %59 = tpu.reciprocal %58 {approx = true} : vector<8x1xf32> -> vector<8x1xf32>
    %60 = vector.broadcast %59 : vector<8x1xf32> to vector<8x8xf32>
    %61 = arith.mulf %56, %60 : vector<8x8xf32>
    %62 = arith.truncf %61 : vector<8x8xf32> to vector<8x8xbf16>
    %cst_18 = arith.constant dense<0.000000e+00> : vector<8x8xf32>
    %63 = tpu.matmul %62, %46, %cst_18 {dimension_numbers = #tpu.dot_dimension_numbers<[1], [0], [0], [1], [0, 0, 1, 1], [], []>} : vector<8x8xbf16>, vector<8x8xbf16>, vector<8x8xf32> -> vector<8x8xf32>
    %64 = vector.extract_strided_slice %1 {offsets = [0, 24], sizes = [8, 8], strides = [1, 1]} : vector<8x96xbf16> to vector<8x8xbf16>
    %65 = vector.extract_strided_slice %1 {offsets = [0, 56], sizes = [8, 8], strides = [1, 1]} : vector<8x96xbf16> to vector<8x8xbf16>
    %66 = vector.extract_strided_slice %1 {offsets = [0, 88], sizes = [8, 8], strides = [1, 1]} : vector<8x96xbf16> to vector<8x8xbf16>
    %cst_19 = arith.constant dense<0.000000e+00> : vector<8x8xf32>
    %67 = tpu.matmul %64, %65, %cst_19 {dimension_numbers = #tpu.dot_dimension_numbers<[1], [1], [0], [0], [0, 0, 1, 0], [], []>} : vector<8x8xbf16>, vector<8x8xbf16>, vector<8x8xf32> -> vector<8x8xf32>
    %cst_20 = arith.constant 0.353553385 : f32
    %68 = vector.broadcast %cst_20 : f32 to vector<8x8xf32>
    %69 = arith.mulf %67, %68 : vector<8x8xf32>
    %70 = vector.broadcast %3 : vector<1x8xf32> to vector<8x8xf32>
    %71 = arith.addf %69, %70 : vector<8x8xf32>
    %cst_21 = arith.constant dense<0xFF800000> : vector<8xf32>
    %72 = vector.multi_reduction <maximumf>, %71, %cst_21 [1] : vector<8x8xf32> to vector<8xf32>
    %73 = vector.shape_cast %72 : vector<8xf32> to vector<8x1xf32>
    %74 = vector.broadcast %73 : vector<8x1xf32> to vector<8x8xf32>
    %75 = arith.subf %71, %74 : vector<8x8xf32>
    %76 = math.exp %75 : vector<8x8xf32>
    %cst_22 = arith.constant dense<0.000000e+00> : vector<8xf32>
    %77 = vector.multi_reduction <add>, %76, %cst_22 [1] : vector<8x8xf32> to vector<8xf32>
    %78 = vector.shape_cast %77 : vector<8xf32> to vector<8x1xf32>
    %79 = tpu.reciprocal %78 {approx = true} : vector<8x1xf32> -> vector<8x1xf32>
    %80 = vector.broadcast %79 : vector<8x1xf32> to vector<8x8xf32>
    %81 = arith.mulf %76, %80 : vector<8x8xf32>
    %82 = arith.truncf %81 : vector<8x8xf32> to vector<8x8xbf16>
    %cst_23 = arith.constant dense<0.000000e+00> : vector<8x8xf32>
    %83 = tpu.matmul %82, %66, %cst_23 {dimension_numbers = #tpu.dot_dimension_numbers<[1], [0], [0], [1], [0, 0, 1, 1], [], []>} : vector<8x8xbf16>, vector<8x8xbf16>, vector<8x8xf32> -> vector<8x8xf32>
    %84 = tpu.concatenate %23, %43, %63, %83 in 1 : vector<8x8xf32>, vector<8x8xf32>, vector<8x8xf32>, vector<8x8xf32> -> vector<8x32xf32>
    %85 = arith.truncf %84 : vector<8x32xf32> to vector<8x32xbf16>
    %c0_24 = arith.constant 0 : index
    %c0_25 = arith.constant 0 : index
    %c0_26 = arith.constant 0 : index
    %86 = vector.load %arg3[%c0_24, %c0_25, %c0_26] : memref<1x8x32xbf16, #tpu.memory_space<vmem>>, vector<1x8x32xbf16>
    %87 = vector.shape_cast %86 : vector<1x8x32xbf16> to vector<8x32xbf16>
    %88 = vector.shape_cast %85 : vector<8x32xbf16> to vector<1x8x32xbf16>
    tpu.vector_store %arg3[%c0_24, %c0_25, %c0_26], %88 {strides = array<i32>} : memref<1x8x32xbf16, #tpu.memory_space<vmem>>, vector<1x8x32xbf16>,
    return
  }
  func.func @transform_0(%arg0: i32) -> (i32, i32, i32) {
    %c0_i32 = arith.constant 0 : i32
    %c0_i32_0 = arith.constant 0 : i32
    %c0_i32_1 = arith.constant 0 : i32
    return %arg0, %c0_i32, %c0_i32_0 : i32, i32, i32
  }
  func.func @transform_1(%arg0: i32) -> (i32, i32, i32) {
    %c0_i32 = arith.constant 0 : i32
    %c0_i32_0 = arith.constant 0 : i32
    %c0_i32_1 = arith.constant 0 : i32
    return %arg0, %c0_i32, %c0_i32_0 : i32, i32, i32
  }
  func.func @transform_2(%arg0: i32) -> (i32, i32, i32) {
    %c0_i32 = arith.constant 0 : i32
    %c0_i32_0 = arith.constant 0 : i32
    %c0_i32_1 = arith.constant 0 : i32
    return %arg0, %c0_i32, %c0_i32_0 : i32, i32, i32
  }
}

module attributes {stable_mosaic.version = 11 : i64} {
  func.func @_matmul_kernel(%arg0: i32, %arg1: i32, %arg2: i32, %arg3: memref<16x64xbf16, #tpu.memory_space<vmem>>, %arg4: memref<64x32xbf16, #tpu.memory_space<vmem>>, %arg5: memref<1x32xf32, #tpu.memory_space<vmem>>, %arg6: memref<16x32xbf16, #tpu.memory_space<vmem>>, %arg7: memref<16x32xf32, #tpu.memory_space<vmem>>) attributes {dimension_semantics = [#tpu.dimension_semantics<parallel>, #tpu.dimension_semantics<parallel>, #tpu.dimension_semantics<arbitrary>], iteration_bounds = array<i64: 1, 1, 1>, scalar_prefetch = 0 : i64, scratch_operands = 1 : i64, tpu.core_type = #tpu.core_type<tc>, window_params = [{transform_indices = @transform_0, window_bounds = array<i64: 16, 64>}, {transform_indices = @transform_1, window_bounds = array<i64: 64, 32>}, {transform_indices = @transform_2, window_bounds = array<i64: 1, 32>}, {transform_indices = @transform_3, window_bounds = array<i64: 16, 32>}]} {
    %c0_i32 = arith.constant 0 : i32
    %0 = arith.cmpi eq, %arg2, %c0_i32 : i32
    %1 = arith.extui %0 : i1 to i32
    %c0_i32_0 = arith.constant 0 : i32
    %2 = arith.cmpi ne, %1, %c0_i32_0 : i32
    scf.if %2 {
      %cst_10 = arith.constant 0.000000e+00 : f32
      %12 = vector.broadcast %cst_10 : f32 to vector<16x32xf32>
      %c0_11 = arith.constant 0 : index
      %c0_12 = arith.constant 0 : index
      %13 = vector.load %arg7[%c0_11, %c0_12] : memref<16x32xf32, #tpu.memory_space<vmem>>, vector<16x32xf32>
      tpu.vector_store %arg7[%c0_11, %c0_12], %12 {strides = array<i32>} : memref<16x32xf32, #tpu.memory_space<vmem>>, vector<16x32xf32>,
    } else {
    }
    %c0 = arith.constant 0 : index
    %c0_1 = arith.constant 0 : index
    %3 = vector.load %arg7[%c0, %c0_1] : memref<16x32xf32, #tpu.memory_space<vmem>>, vector<16x32xf32>
    %c0_2 = arith.constant 0 : index
    %c0_3 = arith.constant 0 : index
    %4 = vector.load %arg3[%c0_2, %c0_3] : memref<16x64xbf16, #tpu.memory_space<vmem>>, vector<16x64xbf16>
    %c0_4 = arith.constant 0 : index
    %c0_5 = arith.constant 0 : index
    %5 = vector.load %arg4[%c0_4, %c0_5] : memref<64x32xbf16, #tpu.memory_space<vmem>>, vector<64x32xbf16>
    %cst = arith.constant dense<0.000000e+00> : vector<16x32xf32>
    %6 = tpu.matmul %4, %5, %cst {dimension_numbers = #tpu.dot_dimension_numbers<[1], [0], [0], [1], [0, 0, 1, 1], [], []>} : vector<16x64xbf16>, vector<64x32xbf16>, vector<16x32xf32> -> vector<16x32xf32>
    %7 = arith.addf %3, %6 : vector<16x32xf32>
    %c0_6 = arith.constant 0 : index
    %c0_7 = arith.constant 0 : index
    %8 = vector.load %arg7[%c0_6, %c0_7] : memref<16x32xf32, #tpu.memory_space<vmem>>, vector<16x32xf32>
    tpu.vector_store %arg7[%c0_6, %c0_7], %7 {strides = array<i32>} : memref<16x32xf32, #tpu.memory_space<vmem>>, vector<16x32xf32>,
    %c0_i32_8 = arith.constant 0 : i32
    %9 = arith.cmpi eq, %arg2, %c0_i32_8 : i32
    %10 = arith.extui %9 : i1 to i32
    %c0_i32_9 = arith.constant 0 : i32
    %11 = arith.cmpi ne, %10, %c0_i32_9 : i32
    scf.if %11 {
      %c0_10 = arith.constant 0 : index
      %c0_11 = arith.constant 0 : index
      %12 = vector.load %arg7[%c0_10, %c0_11] : memref<16x32xf32, #tpu.memory_space<vmem>>, vector<16x32xf32>
      %c0_12 = arith.constant 0 : index
      %c0_13 = arith.constant 0 : index
      %13 = vector.load %arg5[%c0_12, %c0_13] : memref<1x32xf32, #tpu.memory_space<vmem>>, vector<1x32xf32>
      %14 = vector.broadcast %13 : vector<1x32xf32> to vector<16x32xf32>
      %15 = arith.addf %12, %14 : vector<16x32xf32>
      %16 = arith.truncf %15 : vector<16x32xf32> to vector<16x32xbf16>
      %c0_14 = arith.constant 0 : index
      %c0_15 = arith.constant 0 : index
      %17 = vector.load %arg6[%c0_14, %c0_15] : memref<16x32xbf16, #tpu.memory_space<vmem>>, vector<16x32xbf16>
      tpu.vector_store %arg6[%c0_14, %c0_15], %16 {strides = array<i32>} : memref<16x32xbf16, #tpu.memory_space<vmem>>, vector<16x32xbf16>,
    } else {
    }
    return
  }
  func.func @transform_0(%arg0: i32, %arg1: i32, %arg2: i32) -> (i32, i32) {
    %c0_i32 = arith.constant 0 : i32
    return %arg0, %arg2 : i32, i32
  }
  func.func @transform_1(%arg0: i32, %arg1: i32, %arg2: i32) -> (i32, i32) {
    %c0_i32 = arith.constant 0 : i32
    return %arg2, %arg1 : i32, i32
  }
  func.func @transform_2(%arg0: i32, %arg1: i32, %arg2: i32) -> (i32, i32) {
    %c0_i32 = arith.constant 0 : i32
    %c0_i32_0 = arith.constant 0 : i32
    return %c0_i32, %arg1 : i32, i32
  }
  func.func @transform_3(%arg0: i32, %arg1: i32, %arg2: i32) -> (i32, i32) {
    %c0_i32 = arith.constant 0 : i32
    return %arg0, %arg1 : i32, i32
  }
}

module attributes {stable_mosaic.version = 11 : i64} {
  func.func @_matmul_kernel(%arg0: i32, %arg1: i32, %arg2: i32, %arg3: memref<16x32xbf16, #tpu.memory_space<vmem>>, %arg4: memref<32x64xbf16, #tpu.memory_space<vmem>>, %arg5: memref<1x64xf32, #tpu.memory_space<vmem>>, %arg6: memref<16x64xbf16, #tpu.memory_space<vmem>>, %arg7: memref<16x64xf32, #tpu.memory_space<vmem>>) attributes {dimension_semantics = [#tpu.dimension_semantics<parallel>, #tpu.dimension_semantics<parallel>, #tpu.dimension_semantics<arbitrary>], iteration_bounds = array<i64: 1, 1, 1>, scalar_prefetch = 0 : i64, scratch_operands = 1 : i64, tpu.core_type = #tpu.core_type<tc>, window_params = [{transform_indices = @transform_0, window_bounds = array<i64: 16, 32>}, {transform_indices = @transform_1, window_bounds = array<i64: 32, 64>}, {transform_indices = @transform_2, window_bounds = array<i64: 1, 64>}, {transform_indices = @transform_3, window_bounds = array<i64: 16, 64>}]} {
    %c0_i32 = arith.constant 0 : i32
    %0 = arith.cmpi eq, %arg2, %c0_i32 : i32
    %1 = arith.extui %0 : i1 to i32
    %c0_i32_0 = arith.constant 0 : i32
    %2 = arith.cmpi ne, %1, %c0_i32_0 : i32
    scf.if %2 {
      %cst_10 = arith.constant 0.000000e+00 : f32
      %12 = vector.broadcast %cst_10 : f32 to vector<16x64xf32>
      %c0_11 = arith.constant 0 : index
      %c0_12 = arith.constant 0 : index
      %13 = vector.load %arg7[%c0_11, %c0_12] : memref<16x64xf32, #tpu.memory_space<vmem>>, vector<16x64xf32>
      tpu.vector_store %arg7[%c0_11, %c0_12], %12 {strides = array<i32>} : memref<16x64xf32, #tpu.memory_space<vmem>>, vector<16x64xf32>,
    } else {
    }
    %c0 = arith.constant 0 : index
    %c0_1 = arith.constant 0 : index
    %3 = vector.load %arg7[%c0, %c0_1] : memref<16x64xf32, #tpu.memory_space<vmem>>, vector<16x64xf32>
    %c0_2 = arith.constant 0 : index
    %c0_3 = arith.constant 0 : index
    %4 = vector.load %arg3[%c0_2, %c0_3] : memref<16x32xbf16, #tpu.memory_space<vmem>>, vector<16x32xbf16>
    %c0_4 = arith.constant 0 : index
    %c0_5 = arith.constant 0 : index
    %5 = vector.load %arg4[%c0_4, %c0_5] : memref<32x64xbf16, #tpu.memory_space<vmem>>, vector<32x64xbf16>
    %cst = arith.constant dense<0.000000e+00> : vector<16x64xf32>
    %6 = tpu.matmul %4, %5, %cst {dimension_numbers = #tpu.dot_dimension_numbers<[1], [0], [0], [1], [0, 0, 1, 1], [], []>} : vector<16x32xbf16>, vector<32x64xbf16>, vector<16x64xf32> -> vector<16x64xf32>
    %7 = arith.addf %3, %6 : vector<16x64xf32>
    %c0_6 = arith.constant 0 : index
    %c0_7 = arith.constant 0 : index
    %8 = vector.load %arg7[%c0_6, %c0_7] : memref<16x64xf32, #tpu.memory_space<vmem>>, vector<16x64xf32>
    tpu.vector_store %arg7[%c0_6, %c0_7], %7 {strides = array<i32>} : memref<16x64xf32, #tpu.memory_space<vmem>>, vector<16x64xf32>,
    %c0_i32_8 = arith.constant 0 : i32
    %9 = arith.cmpi eq, %arg2, %c0_i32_8 : i32
    %10 = arith.extui %9 : i1 to i32
    %c0_i32_9 = arith.constant 0 : i32
    %11 = arith.cmpi ne, %10, %c0_i32_9 : i32
    scf.if %11 {
      %c0_10 = arith.constant 0 : index
      %c0_11 = arith.constant 0 : index
      %12 = vector.load %arg7[%c0_10, %c0_11] : memref<16x64xf32, #tpu.memory_space<vmem>>, vector<16x64xf32>
      %c0_12 = arith.constant 0 : index
      %c0_13 = arith.constant 0 : index
      %13 = vector.load %arg5[%c0_12, %c0_13] : memref<1x64xf32, #tpu.memory_space<vmem>>, vector<1x64xf32>
      %14 = vector.broadcast %13 : vector<1x64xf32> to vector<16x64xf32>
      %15 = arith.addf %12, %14 : vector<16x64xf32>
      %cst_14 = arith.constant 5.000000e-01 : f32
      %16 = vector.broadcast %cst_14 : f32 to vector<16x64xf32>
      %17 = arith.mulf %16, %15 : vector<16x64xf32>
      %cst_15 = arith.constant 0.707106769 : f32
      %18 = vector.broadcast %cst_15 : f32 to vector<16x64xf32>
      %19 = arith.mulf %15, %18 : vector<16x64xf32>
      %20 = math.erf %19 : vector<16x64xf32>
      %cst_16 = arith.constant 1.000000e+00 : f32
      %21 = vector.broadcast %cst_16 : f32 to vector<16x64xf32>
      %22 = arith.addf %21, %20 : vector<16x64xf32>
      %23 = arith.mulf %17, %22 : vector<16x64xf32>
      %24 = arith.truncf %23 : vector<16x64xf32> to vector<16x64xbf16>
      %c0_17 = arith.constant 0 : index
      %c0_18 = arith.constant 0 : index
      %25 = vector.load %arg6[%c0_17, %c0_18] : memref<16x64xbf16, #tpu.memory_space<vmem>>, vector<16x64xbf16>
      tpu.vector_store %arg6[%c0_17, %c0_18], %24 {strides = array<i32>} : memref<16x64xbf16, #tpu.memory_space<vmem>>, vector<16x64xbf16>,
    } else {
    }
    return
  }
  func.func @transform_0(%arg0: i32, %arg1: i32, %arg2: i32) -> (i32, i32) {
    %c0_i32 = arith.constant 0 : i32
    return %arg0, %arg2 : i32, i32
  }
  func.func @transform_1(%arg0: i32, %arg1: i32, %arg2: i32) -> (i32, i32) {
    %c0_i32 = arith.constant 0 : i32
    return %arg2, %arg1 : i32, i32
  }
  func.func @transform_2(%arg0: i32, %arg1: i32, %arg2: i32) -> (i32, i32) {
    %c0_i32 = arith.constant 0 : i32
    %c0_i32_0 = arith.constant 0 : i32
    return %c0_i32, %arg1 : i32, i32
  }
  func.func @transform_3(%arg0: i32, %arg1: i32, %arg2: i32) -> (i32, i32) {
    %c0_i32 = arith.constant 0 : i32
    return %arg0, %arg1 : i32, i32
  }
}

module attributes {stable_mosaic.version = 11 : i64} {
  func.func @_residual_layernorm_kernel(%arg0: i32, %arg1: memref<16x32xbf16, #tpu.memory_space<vmem>>, %arg2: memref<16x32xbf16, #tpu.memory_space<vmem>>, %arg3: memref<1x32xf32, #tpu.memory_space<vmem>>, %arg4: memref<1x32xf32, #tpu.memory_space<vmem>>, %arg5: memref<16x32xbf16, #tpu.memory_space<vmem>>) attributes {dimension_semantics = [#tpu.dimension_semantics<parallel>], iteration_bounds = array<i64: 1>, scalar_prefetch = 0 : i64, scratch_operands = 0 : i64, tpu.core_type = #tpu.core_type<tc>, window_params = [{transform_indices = @transform_0, window_bounds = array<i64: 16, 32>}, {transform_indices = @transform_1, window_bounds = array<i64: 16, 32>}, {pipeline_mode = #tpu.pipeline_mode<synchronous>, transform_indices = @transform_2, window_bounds = array<i64: 1, 32>}, {pipeline_mode = #tpu.pipeline_mode<synchronous>, transform_indices = @transform_3, window_bounds = array<i64: 1, 32>}, {transform_indices = @transform_4, window_bounds = array<i64: 16, 32>}]} {
    %c0 = arith.constant 0 : index
    %c0_0 = arith.constant 0 : index
    %0 = vector.load %arg1[%c0, %c0_0] : memref<16x32xbf16, #tpu.memory_space<vmem>>, vector<16x32xbf16>
    %1 = arith.extf %0 : vector<16x32xbf16> to vector<16x32xf32>
    %c0_1 = arith.constant 0 : index
    %c0_2 = arith.constant 0 : index
    %2 = vector.load %arg2[%c0_1, %c0_2] : memref<16x32xbf16, #tpu.memory_space<vmem>>, vector<16x32xbf16>
    %3 = arith.extf %2 : vector<16x32xbf16> to vector<16x32xf32>
    %4 = arith.addf %1, %3 : vector<16x32xf32>
    %c0_3 = arith.constant 0 : index
    %c0_4 = arith.constant 0 : index
    %5 = vector.load %arg3[%c0_3, %c0_4] : memref<1x32xf32, #tpu.memory_space<vmem>>, vector<1x32xf32>
    %c0_5 = arith.constant 0 : index
    %c0_6 = arith.constant 0 : index
    %6 = vector.load %arg4[%c0_5, %c0_6] : memref<1x32xf32, #tpu.memory_space<vmem>>, vector<1x32xf32>
    %cst = arith.constant dense<0.000000e+00> : vector<16xf32>
    %7 = vector.multi_reduction <add>, %4, %cst [1] : vector<16x32xf32> to vector<16xf32>
    %8 = vector.shape_cast %7 : vector<16xf32> to vector<16x1xf32>
    %cst_7 = arith.constant 3.200000e+01 : f32
    %9 = vector.broadcast %cst_7 : f32 to vector<16x1xf32>
    %10 = arith.divf %8, %9 : vector<16x1xf32>
    %11 = vector.broadcast %10 : vector<16x1xf32> to vector<16x32xf32>
    %12 = arith.subf %4, %11 : vector<16x32xf32>
    %13 = arith.mulf %12, %12 : vector<16x32xf32>
    %cst_8 = arith.constant dense<0.000000e+00> : vector<16xf32>
    %14 = vector.multi_reduction <add>, %13, %cst_8 [1] : vector<16x32xf32> to vector<16xf32>
    %15 = vector.shape_cast %14 : vector<16xf32> to vector<16x1xf32>
    %cst_9 = arith.constant 3.200000e+01 : f32
    %16 = vector.broadcast %cst_9 : f32 to vector<16x1xf32>
    %17 = arith.divf %15, %16 : vector<16x1xf32>
    %cst_10 = arith.constant 9.99999996E-13 : f32
    %18 = vector.broadcast %cst_10 : f32 to vector<16x1xf32>
    %19 = arith.addf %17, %18 : vector<16x1xf32>
    %20 = math.rsqrt %19 : vector<16x1xf32>
    %21 = vector.broadcast %10 : vector<16x1xf32> to vector<16x32xf32>
    %22 = arith.subf %4, %21 : vector<16x32xf32>
    %23 = vector.broadcast %20 : vector<16x1xf32> to vector<16x32xf32>
    %24 = arith.mulf %22, %23 : vector<16x32xf32>
    %25 = vector.broadcast %5 : vector<1x32xf32> to vector<16x32xf32>
    %26 = arith.mulf %24, %25 : vector<16x32xf32>
    %27 = vector.broadcast %6 : vector<1x32xf32> to vector<16x32xf32>
    %28 = arith.addf %26, %27 : vector<16x32xf32>
    %29 = arith.truncf %28 : vector<16x32xf32> to vector<16x32xbf16>
    %c0_11 = arith.constant 0 : index
    %c0_12 = arith.constant 0 : index
    %30 = vector.load %arg5[%c0_11, %c0_12] : memref<16x32xbf16, #tpu.memory_space<vmem>>, vector<16x32xbf16>
    tpu.vector_store %arg5[%c0_11, %c0_12], %29 {strides = array<i32>} : memref<16x32xbf16, #tpu.memory_space<vmem>>, vector<16x32xbf16>,
    return
  }
  func.func @transform_0(%arg0: i32) -> (i32, i32) {
    %c0_i32 = arith.constant 0 : i32
    %c0_i32_0 = arith.constant 0 : i32
    return %arg0, %c0_i32 : i32, i32
  }
  func.func @transform_1(%arg0: i32) -> (i32, i32) {
    %c0_i32 = arith.constant 0 : i32
    %c0_i32_0 = arith.constant 0 : i32
    return %arg0, %c0_i32 : i32, i32
  }
  func.func @transform_2(%arg0: i32) -> (i32, i32) {
    %c0_i32 = arith.constant 0 : i32
    %c0_i32_0 = arith.constant 0 : i32
    %c0_i32_1 = arith.constant 0 : i32
    return %c0_i32, %c0_i32_0 : i32, i32
  }
  func.func @transform_3(%arg0: i32) -> (i32, i32) {
    %c0_i32 = arith.constant 0 : i32
    %c0_i32_0 = arith.constant 0 : i32
    %c0_i32_1 = arith.constant 0 : i32
    return %c0_i32, %c0_i32_0 : i32, i32
  }
  func.func @transform_4(%arg0: i32) -> (i32, i32) {
    %c0_i32 = arith.constant 0 : i32
    %c0_i32_0 = arith.constant 0 : i32
    return %arg0, %c0_i32 : i32, i32
  }
}

module attributes {stable_mosaic.version = 11 : i64} {
  func.func @_head_kernel(%arg0: i32, %arg1: memref<2x8x32xbf16, #tpu.memory_space<vmem>>, %arg2: memref<32x4xf32, #tpu.memory_space<vmem>>, %arg3: memref<1x4xf32, #tpu.memory_space<vmem>>, %arg4: memref<2x4xf32, #tpu.memory_space<vmem>>, %arg5: memref<2x32xf32, #tpu.memory_space<vmem>>) attributes {dimension_semantics = [#tpu.dimension_semantics<arbitrary>], iteration_bounds = array<i64: 1>, scalar_prefetch = 0 : i64, scratch_operands = 1 : i64, tpu.core_type = #tpu.core_type<tc>, window_params = [{transform_indices = @transform_0, window_bounds = array<i64: 2, 8, 32>}, {pipeline_mode = #tpu.pipeline_mode<synchronous>, transform_indices = @transform_1, window_bounds = array<i64: 32, 4>}, {pipeline_mode = #tpu.pipeline_mode<synchronous>, transform_indices = @transform_2, window_bounds = array<i64: 1, 4>}, {pipeline_mode = #tpu.pipeline_mode<synchronous>, transform_indices = @transform_3, window_bounds = array<i64: 2, 4>}]} {
    %c0_i32 = arith.constant 0 : i32
    %0 = arith.cmpi eq, %arg0, %c0_i32 : i32
    %1 = arith.extui %0 : i1 to i32
    %c0_i32_0 = arith.constant 0 : i32
    %2 = arith.cmpi ne, %1, %c0_i32_0 : i32
    scf.if %2 {
      %cst_9 = arith.constant 0xFF800000 : f32
      %12 = vector.broadcast %cst_9 : f32 to vector<2x32xf32>
      %c0_10 = arith.constant 0 : index
      %c0_11 = arith.constant 0 : index
      %13 = vector.load %arg5[%c0_10, %c0_11] : memref<2x32xf32, #tpu.memory_space<vmem>>, vector<2x32xf32>
      tpu.vector_store %arg5[%c0_10, %c0_11], %12 {strides = array<i32>} : memref<2x32xf32, #tpu.memory_space<vmem>>, vector<2x32xf32>,
    } else {
    }
    %c0 = arith.constant 0 : index
    %c0_1 = arith.constant 0 : index
    %c0_2 = arith.constant 0 : index
    %3 = vector.load %arg1[%c0, %c0_1, %c0_2] : memref<2x8x32xbf16, #tpu.memory_space<vmem>>, vector<2x8x32xbf16>
    %4 = arith.extf %3 : vector<2x8x32xbf16> to vector<2x8x32xf32>
    %c0_3 = arith.constant 0 : index
    %c0_4 = arith.constant 0 : index
    %5 = vector.load %arg5[%c0_3, %c0_4] : memref<2x32xf32, #tpu.memory_space<vmem>>, vector<2x32xf32>
    %cst = arith.constant dense<0xFF800000> : vector<2x32xf32>
    %6 = vector.multi_reduction <maximumf>, %4, %cst [1] : vector<2x8x32xf32> to vector<2x32xf32>
    %7 = arith.maximumf %5, %6 : vector<2x32xf32>
    %c0_5 = arith.constant 0 : index
    %c0_6 = arith.constant 0 : index
    %8 = vector.load %arg5[%c0_5, %c0_6] : memref<2x32xf32, #tpu.memory_space<vmem>>, vector<2x32xf32>
    tpu.vector_store %arg5[%c0_5, %c0_6], %7 {strides = array<i32>} : memref<2x32xf32, #tpu.memory_space<vmem>>, vector<2x32xf32>,
    %c0_i32_7 = arith.constant 0 : i32
    %9 = arith.cmpi eq, %arg0, %c0_i32_7 : i32
    %10 = arith.extui %9 : i1 to i32
    %c0_i32_8 = arith.constant 0 : i32
    %11 = arith.cmpi ne, %10, %c0_i32_8 : i32
    scf.if %11 {
      %c0_9 = arith.constant 0 : index
      %c0_10 = arith.constant 0 : index
      %12 = vector.load %arg5[%c0_9, %c0_10] : memref<2x32xf32, #tpu.memory_space<vmem>>, vector<2x32xf32>
      %c0_11 = arith.constant 0 : index
      %c0_12 = arith.constant 0 : index
      %13 = vector.load %arg2[%c0_11, %c0_12] : memref<32x4xf32, #tpu.memory_space<vmem>>, vector<32x4xf32>
      %cst_13 = arith.constant dense<0.000000e+00> : vector<2x4xf32>
      %14 = tpu.matmul %12, %13, %cst_13 {dimension_numbers = #tpu.dot_dimension_numbers<[1], [0], [0], [1], [0, 0, 1, 1], [], []>} : vector<2x32xf32>, vector<32x4xf32>, vector<2x4xf32> -> vector<2x4xf32>
      %c0_14 = arith.constant 0 : index
      %c0_15 = arith.constant 0 : index
      %15 = vector.load %arg3[%c0_14, %c0_15] : memref<1x4xf32, #tpu.memory_space<vmem>>, vector<1x4xf32>
      %16 = vector.broadcast %15 : vector<1x4xf32> to vector<2x4xf32>
      %17 = arith.addf %14, %16 : vector<2x4xf32>
      %cst_16 = arith.constant dense<0xFF800000> : vector<2xf32>
      %18 = vector.multi_reduction <maximumf>, %17, %cst_16 [1] : vector<2x4xf32> to vector<2xf32>
      %19 = vector.shape_cast %18 : vector<2xf32> to vector<2x1xf32>
      %20 = vector.broadcast %19 : vector<2x1xf32> to vector<2x4xf32>
      %21 = arith.subf %17, %20 : vector<2x4xf32>
      %22 = math.exp %21 : vector<2x4xf32>
      %cst_17 = arith.constant dense<0.000000e+00> : vector<2xf32>
      %23 = vector.multi_reduction <add>, %22, %cst_17 [1] : vector<2x4xf32> to vector<2xf32>
      %24 = vector.shape_cast %23 : vector<2xf32> to vector<2x1xf32>
      %25 = vector.broadcast %24 : vector<2x1xf32> to vector<2x4xf32>
      %26 = arith.divf %22, %25 : vector<2x4xf32>
      %c0_18 = arith.constant 0 : index
      %c0_19 = arith.constant 0 : index
      %27 = vector.load %arg4[%c0_18, %c0_19] : memref<2x4xf32, #tpu.memory_space<vmem>>, vector<2x4xf32>
      tpu.vector_store %arg4[%c0_18, %c0_19], %26 {strides = array<i32>} : memref<2x4xf32, #tpu.memory_space<vmem>>, vector<2x4xf32>,
    } else {
    }
    return
  }
  func.func @transform_0(%arg0: i32) -> (i32, i32, i32) {
    %c0_i32 = arith.constant 0 : i32
    %c0_i32_0 = arith.constant 0 : i32
    %c0_i32_1 = arith.constant 0 : i32
    return %c0_i32, %arg0, %c0_i32_0 : i32, i32, i32
  }
  func.func @transform_1(%arg0: i32) -> (i32, i32) {
    %c0_i32 = arith.constant 0 : i32
    %c0_i32_0 = arith.constant 0 : i32
    %c0_i32_1 = arith.constant 0 : i32
    return %c0_i32, %c0_i32_0 : i32, i32
  }
  func.func @transform_2(%arg0: i32) -> (i32, i32) {
    %c0_i32 = arith.constant 0 : i32
    %c0_i32_0 = arith.constant 0 : i32
    %c0_i32_1 = arith.constant 0 : i32
    return %c0_i32, %c0_i32_0 : i32, i32
  }
  func.func @transform_3(%arg0: i32) -> (i32, i32) {
    %c0_i32 = arith.constant 0 : i32
    %c0_i32_0 = arith.constant 0 : i32
    %c0_i32_1 = arith.constant 0 : i32
    return %c0_i32, %c0_i32_0 : i32, i32
  }
}

</mosaic_0001>

<llo_original>
// kernel: forward.17
$region0: #{forward.17}
  #allocation0 [shape = 'u32[]', space=smem, size = 0x4, offset = 0x4, fixed_abs, tag = 'smem constant byte address 0x4 - core index']
  #allocation1 [shape = 'u32[144,128]{1,0:T(1,128)}', space=vmem, size = 0x12000, scoped, tag = 'internal scratch']
  #allocation2 [shape = 'f32[16,96]{1,0:T(8,128)}', space=vmem, size = 0x2000, scoped, tag = 'scratch operand']
  %s0 = inlined_call_operand.vmem [shape: bf16[16,32], index: 0, kind: input, shape index: {}]
  %s1 = inlined_call_operand.vmem [shape: bf16[32,96], index: 1, kind: input, shape index: {}]
  %s2 = inlined_call_operand.vmem [shape: f32[1,96], index: 2, kind: input, shape index: {}]
  %s3 = inlined_call_operand.vmem [shape: bf16[16,96], index: 3, kind: output, shape index: {}]
  %s4 = sld [smem:[#allocation0]]
  $region30: #{forward.17} parent=0
    _
  %s6 = ssub.s32 1, %s4
  %s7 = scalar_select 0, %s6, %s4
  // Predicated region
  $region2: #{forward.17} parent=0 // pred_check
    _
  $region3: #{forward.17} parent=0 // pred_check_branch
    %9 = sbr.rel (0) target = $region5
  $region4: #{forward.17} parent=0 // pred_region
    _
  $region5: #{forward.17} parent=0 // pred_fallthru
    _
  // Predicated region
  $region6: #{forward.17} parent=0 // pred_check
    _
  $region7: #{forward.17} parent=0 // pred_check_branch
    %11 = sbr.rel (0) target = $region9
  $region8: #{forward.17} parent=0 // pred_region
    _
  $region9: #{forward.17} parent=0 // pred_fallthru
    _
  // Predicated region
  $region10: #{forward.17} parent=0 // pred_check
    _
  $region11: #{forward.17} parent=0 // pred_check_branch
    %13 = sbr.rel (0) target = $region13
  $region12: #{forward.17} parent=0 // pred_region
    _
  $region13: #{forward.17} parent=0 // pred_fallthru
    _
  %p15 = scmp.eq.s32.totalorder 0, 0
  // Predicated region
  $region14: #{forward.17} parent=0 // pred_check
    %p16 = pneg %p15
  $region15: #{forward.17} parent=0 // pred_check_branch
    %18 = sbr.rel (%p16) target = $region17
  $region16: #{forward.17} parent=0 // pred_region
    %vm19 = vcmask 785408
    %20 = vst.msk [vmem:[#allocation2] sm:$0xff] %vm19, 0.0
    %21 = vst.msk [vmem:[#allocation2 + $0x8] sm:$0xff] %vm19, 0.0
  $region17: #{forward.17} parent=0 // pred_fallthru
    _
  %v22 = vld [vmem:[#allocation2] sm:$0xff]
  %v23 = vld [vmem:[#allocation2 + $0x8] sm:$0xff]
  %v24 = vld [vmem:[%s0] sm:$0xf]
  %v25 = vld [vmem:[%s0 + $0x4] sm:$0xf]
  %v26 = vld [vmem:[%s1] sm:$0xf]
  %v27 = vld [vmem:[%s1 + $0x4] sm:$0xf]
  %v28 = vld [vmem:[%s1 + $0x8] sm:$0xf]
  %v29 = vld [vmem:[%s1 + $0xc] sm:$0xf]
  %v32 = vunpack.c.l.b16 %v24
  %v33 = vunpack.c.l.b16 %v25
  %v34 = vpack.c.b16 %v33, %v32
  %v39 = vunpack.c.l.b16 %v26
  %v40 = vunpack.c.l.b16 %v27
  %v41 = vunpack.c.l.b16 %v28
  %v42 = vunpack.c.l.b16 %v29
  %v43 = vpack.c.b16 %v40, %v39
  %v44 = vpack.c.b16 %v42, %v41
  %vm47 = vcmask 261120
  %v49 = vsel %vm47, %v34, 0
  %51 = vmatprep.subr.bf16.mxu0 0
  %52 = vmatpush1.bf16.msra.mxu0 %v43
  %53 = vmatprep.subr.bf16.mxu0 0
  %54 = vmatpush1.bf16.msra.mxu0 %v44
  %55 = vmatprep.subr.bf16.mxu0 0
  %56 = vmatpush1.bf16.msra.mxu0 0
  %57 = vmatprep.subr.bf16.mxu0 0
  %58 = vmatpush1.bf16.msra.mxu0 0
  %59 = vmatprep.subr.bf16.mxu0 0
  %60 = vmatpush1.bf16.msra.mxu0 0
  %61 = vmatprep.subr.bf16.mxu0 0
  %62 = vmatpush1.bf16.msra.mxu0 0
  %63 = vmatprep.subr.bf16.mxu0 0
  %64 = vmatpush1.bf16.msra.mxu0 0
  %65 = vmatprep.subr.bf16.mxu0 0
  %66 = vmatpush1.bf16.msra.mxu0 0
  %67 = vmatprep.subr.bf16.mxu0 0
  %68 = vmatpush1.bf16.msra.mxu0 0
  %69 = vmatprep.subr.bf16.mxu0 0
  %70 = vmatpush1.bf16.msra.mxu0 0
  %71 = vmatprep.subr.bf16.mxu0 0
  %72 = vmatpush1.bf16.msra.mxu0 0
  %73 = vmatprep.subr.bf16.mxu0 0
  %74 = vmatpush1.bf16.msra.mxu0 0
  %75 = vmatprep.subr.bf16.mxu0 0
  %76 = vmatpush1.bf16.msra.mxu0 0
  %77 = vmatprep.subr.bf16.mxu0 0
  %78 = vmatpush1.bf16.msra.mxu0 0
  %79 = vmatprep.subr.bf16.mxu0 0
  %80 = vmatpush1.bf16.msra.mxu0 0
  %81 = vmatprep.subr.bf16.mxu0 0
  %82 = vmatpush1.bf16.msra.mxu0 0
  %83 = vmatprep.mubr.bf16.mxu0 0
  %84 = vmatmul.mubr.bf16.gmra.mrb[0].mxu0 %v49
  %v85 = vpop.f32.mrb[0].mxu0
  %v86 = vadd.f32 0.0, %v85
  %v87 = vpop.f32.mrb[0].mxu0
  %v88 = vpop.f32.mrb[0].mxu0
  %v89 = vadd.f32 0.0, %v88
  %v90 = vpop.f32.mrb[0].mxu0
  %91 = vdwg.mxu0
  %v92 = vadd.f32 %v22, %v86
  %v93 = vadd.f32 %v23, %v89
  %vm94 = vcmask 785408
  %95 = vst.msk [vmem:[#allocation2] sm:$0xff] %vm94, %v92
  %96 = vst.msk [vmem:[#allocation2 + $0x8] sm:$0xff] %vm94, %v93
  // Predicated region
  $region18: #{forward.17} parent=0 // pred_check
    %p97 = pneg %p15
  $region19: #{forward.17} parent=0 // pred_check_branch
    %99 = sbr.rel (%p97) target = $region21
  $region20: #{forward.17} parent=0 // pred_region
    %v100 = vld [vmem:[#allocation2] sm:$0xff]
    %v101 = vld [vmem:[#allocation2 + $0x8] sm:$0xff]
    %v102 = vld [vmem:[%s2] sm:$0x1]
    %v104 = vlaneseq
    %v105 = vshrl.u32 %v104, 7
    %v106 = vsub.s32 0, %v105
    %v107 = vrot.slane %v102, %v106
    %v109 = vadd.f32 %v100, %v107
    %v110 = vadd.f32 %v101, %v107
    %v111 = vpack.c.bf16 %v110, %v109
    %v113 = vunpack.c.l.b16 %v111
    %v114 = vunpack.c.h.b16 %v111
    %v115 = vpack.c.b16 %v113, %v113
    %v116 = vpack.c.b16 %v114, %v114
    %vm119 = vcmask 781312
    %120 = vst.msk [vmem:[%s3] sm:$0xf] %vm119, %v115
    %121 = vst.msk [vmem:[%s3 + $0x4] sm:$0xf] %vm119, %v116
  $region21: #{forward.17} parent=0 // pred_fallthru
    _
  // Predicated region
  $region22: #{forward.17} parent=0 // pred_check
    _
  $region23: #{forward.17} parent=0 // pred_check_branch
    %123 = sbr.rel (0) target = $region25
  $region24: #{forward.17} parent=0 // pred_region
    _
  $region25: #{forward.17} parent=0 // pred_fallthru
    _
  // Predicated region
  $region26: #{forward.17} parent=0 // pred_check
    _
  $region27: #{forward.17} parent=0 // pred_check_branch
    %125 = sbr.rel (0) target = $region29
  $region28: #{forward.17} parent=0 // pred_region
    _
  $region29: #{forward.17} parent=0 // pred_fallthru
    _

// kernel: forward.19
$region0: #{forward.19}
  #allocation0 [shape = 'u32[]', space=smem, size = 0x4, offset = 0x4, fixed_abs, tag = 'smem constant byte address 0x4 - core index']
  #allocation1 [shape = 'u32[144,128]{1,0:T(1,128)}', space=vmem, size = 0x12000, scoped, tag = 'internal scratch']
  #allocation2 [shape = 'f32[16,32]{1,0:T(8,128)}', space=vmem, size = 0x2000, scoped, tag = 'scratch operand']
  %s0 = inlined_call_operand.vmem [shape: bf16[16,32], index: 0, kind: input, shape index: {}]
  %s1 = inlined_call_operand.vmem [shape: bf16[32,32], index: 1, kind: input, shape index: {}]
  %s2 = inlined_call_operand.vmem [shape: f32[1,32], index: 2, kind: input, shape index: {}]
  %s3 = inlined_call_operand.vmem [shape: bf16[16,32], index: 3, kind: output, shape index: {}]
  %s4 = sld [smem:[#allocation0]]
  $region30: #{forward.19} parent=0
    _
  %s6 = ssub.s32 1, %s4
  %s7 = scalar_select 0, %s6, %s4
  // Predicated region
  $region2: #{forward.19} parent=0 // pred_check
    _
  $region3: #{forward.19} parent=0 // pred_check_branch
    %9 = sbr.rel (0) target = $region5
  $region4: #{forward.19} parent=0 // pred_region
    _
  $region5: #{forward.19} parent=0 // pred_fallthru
    _
  // Predicated region
  $region6: #{forward.19} parent=0 // pred_check
    _
  $region7: #{forward.19} parent=0 // pred_check_branch
    %11 = sbr.rel (0) target = $region9
  $region8: #{forward.19} parent=0 // pred_region
    _
  $region9: #{forward.19} parent=0 // pred_fallthru
    _
  // Predicated region
  $region10: #{forward.19} parent=0 // pred_check
    _
  $region11: #{forward.19} parent=0 // pred_check_branch
    %13 = sbr.rel (0) target = $region13
  $region12: #{forward.19} parent=0 // pred_region
    _
  $region13: #{forward.19} parent=0 // pred_fallthru
    _
  %p15 = scmp.eq.s32.totalorder 0, 0
  // Predicated region
  $region14: #{forward.19} parent=0 // pred_check
    %p16 = pneg %p15
  $region15: #{forward.19} parent=0 // pred_check_branch
    %18 = sbr.rel (%p16) target = $region17
  $region16: #{forward.19} parent=0 // pred_region
    %vm19 = vcmask 261120
    %20 = vst.msk [vmem:[#allocation2] sm:$0xff] %vm19, 0.0
    %21 = vst.msk [vmem:[#allocation2 + $0x8] sm:$0xff] %vm19, 0.0
  $region17: #{forward.19} parent=0 // pred_fallthru
    _
  %v22 = vld [vmem:[#allocation2] sm:$0xff]
  %v23 = vld [vmem:[#allocation2 + $0x8] sm:$0xff]
  %v24 = vld [vmem:[%s0] sm:$0xf]
  %v25 = vld [vmem:[%s0 + $0x4] sm:$0xf]
  %v26 = vld [vmem:[%s1] sm:$0xf]
  %v27 = vld [vmem:[%s1 + $0x4] sm:$0xf]
  %v28 = vld [vmem:[%s1 + $0x8] sm:$0xf]
  %v29 = vld [vmem:[%s1 + $0xc] sm:$0xf]
  %v32 = vunpack.c.l.b16 %v24
  %v33 = vunpack.c.l.b16 %v25
  %v34 = vpack.c.b16 %v33, %v32
  %v39 = vunpack.c.l.b16 %v26
  %v40 = vunpack.c.l.b16 %v27
  %v41 = vunpack.c.l.b16 %v28
  %v42 = vunpack.c.l.b16 %v29
  %v43 = vpack.c.b16 %v40, %v39
  %v44 = vpack.c.b16 %v42, %v41
  %vm47 = vcmask 261120
  %v49 = vsel %vm47, %v34, 0
  %51 = vmatprep.subr.bf16.mxu0 0
  %52 = vmatpush1.bf16.msra.mxu0 %v43
  %53 = vmatprep.subr.bf16.mxu0 0
  %54 = vmatpush1.bf16.msra.mxu0 %v44
  %55 = vmatprep.subr.bf16.mxu0 0
  %56 = vmatpush1.bf16.msra.mxu0 0
  %57 = vmatprep.subr.bf16.mxu0 0
  %58 = vmatpush1.bf16.msra.mxu0 0
  %59 = vmatprep.subr.bf16.mxu0 0
  %60 = vmatpush1.bf16.msra.mxu0 0
  %61 = vmatprep.subr.bf16.mxu0 0
  %62 = vmatpush1.bf16.msra.mxu0 0
  %63 = vmatprep.subr.bf16.mxu0 0
  %64 = vmatpush1.bf16.msra.mxu0 0
  %65 = vmatprep.subr.bf16.mxu0 0
  %66 = vmatpush1.bf16.msra.mxu0 0
  %67 = vmatprep.subr.bf16.mxu0 0
  %68 = vmatpush1.bf16.msra.mxu0 0
  %69 = vmatprep.subr.bf16.mxu0 0
  %70 = vmatpush1.bf16.msra.mxu0 0
  %71 = vmatprep.subr.bf16.mxu0 0
  %72 = vmatpush1.bf16.msra.mxu0 0
  %73 = vmatprep.subr.bf16.mxu0 0
  %74 = vmatpush1.bf16.msra.mxu0 0
  %75 = vmatprep.subr.bf16.mxu0 0
  %76 = vmatpush1.bf16.msra.mxu0 0
  %77 = vmatprep.subr.bf16.mxu0 0
  %78 = vmatpush1.bf16.msra.mxu0 0
  %79 = vmatprep.subr.bf16.mxu0 0
  %80 = vmatpush1.bf16.msra.mxu0 0
  %81 = vmatprep.subr.bf16.mxu0 0
  %82 = vmatpush1.bf16.msra.mxu0 0
  %83 = vmatprep.mubr.bf16.mxu0 0
  %84 = vmatmul.mubr.bf16.gmra.mrb[0].mxu0 %v49
  %v85 = vpop.f32.mrb[0].mxu0
  %v86 = vadd.f32 0.0, %v85
  %v87 = vpop.f32.mrb[0].mxu0
  %v88 = vpop.f32.mrb[0].mxu0
  %v89 = vadd.f32 0.0, %v88
  %v90 = vpop.f32.mrb[0].mxu0
  %91 = vdwg.mxu0
  %v92 = vadd.f32 %v22, %v86
  %v93 = vadd.f32 %v23, %v89
  %94 = vst.msk [vmem:[#allocation2] sm:$0xff] %vm47, %v92
  %95 = vst.msk [vmem:[#allocation2 + $0x8] sm:$0xff] %vm47, %v93
  // Predicated region
  $region18: #{forward.19} parent=0 // pred_check
    %p96 = pneg %p15
  $region19: #{forward.19} parent=0 // pred_check_branch
    %98 = sbr.rel (%p96) target = $region21
  $region20: #{forward.19} parent=0 // pred_region
    %v99 = vld [vmem:[#allocation2] sm:$0xff]
    %v100 = vld [vmem:[#allocation2 + $0x8] sm:$0xff]
    %v101 = vld [vmem:[%s2] sm:$0x1]
    %v103 = vlaneseq
    %v104 = vshrl.u32 %v103, 7
    %v105 = vsub.s32 0, %v104
    %v106 = vrot.slane %v101, %v105
    %v108 = vadd.f32 %v99, %v106
    %v109 = vadd.f32 %v100, %v106
    %v110 = vpack.c.bf16 %v109, %v108
    %v112 = vunpack.c.l.b16 %v110
    %v113 = vunpack.c.h.b16 %v110
    %v114 = vpack.c.b16 %v112, %v112
    %v115 = vpack.c.b16 %v113, %v113
    %vm118 = vcmask 257024
    %119 = vst.msk [vmem:[%s3] sm:$0xf] %vm118, %v114
    %120 = vst.msk [vmem:[%s3 + $0x4] sm:$0xf] %vm118, %v115
  $region21: #{forward.19} parent=0 // pred_fallthru
    _
  // Predicated region
  $region22: #{forward.19} parent=0 // pred_check
    _
  $region23: #{forward.19} parent=0 // pred_check_branch
    %122 = sbr.rel (0) target = $region25
  $region24: #{forward.19} parent=0 // pred_region
    _
  $region25: #{forward.19} parent=0 // pred_fallthru
    _
  // Predicated region
  $region26: #{forward.19} parent=0 // pred_check
    _
  $region27: #{forward.19} parent=0 // pred_check_branch
    %124 = sbr.rel (0) target = $region29
  $region28: #{forward.19} parent=0 // pred_region
    _
  $region29: #{forward.19} parent=0 // pred_fallthru
    _

// kernel: forward.16
$region0: #{forward.16}
  #allocation0 [shape = 'u32[]', space=smem, size = 0x4, offset = 0x4, fixed_abs, tag = 'smem constant byte address 0x4 - core index']
  #allocation1 [shape = 'u32[144,128]{1,0:T(1,128)}', space=vmem, size = 0x12000, scoped, tag = 'internal scratch']
  %s0 = inlined_call_operand.vmem [shape: f32[16,32], index: 0, kind: input, shape index: {}]
  %s1 = inlined_call_operand.vmem [shape: f32[1,32], index: 1, kind: input, shape index: {}]
  %s2 = inlined_call_operand.vmem [shape: f32[1,32], index: 2, kind: input, shape index: {}]
  %s3 = inlined_call_operand.vmem [shape: bf16[16,32], index: 3, kind: output, shape index: {}]
  %s4 = sld [smem:[#allocation0]]
  $region22: #{forward.16} parent=0
    _
  %s6 = ssub.s32 1, %s4
  %s7 = scalar_select 0, %s6, %s4
  // Predicated region
  $region2: #{forward.16} parent=0 // pred_check
    _
  $region3: #{forward.16} parent=0 // pred_check_branch
    %9 = sbr.rel (0) target = $region5
  $region4: #{forward.16} parent=0 // pred_region
    _
  $region5: #{forward.16} parent=0 // pred_fallthru
    _
  // Predicated region
  $region6: #{forward.16} parent=0 // pred_check
    _
  $region7: #{forward.16} parent=0 // pred_check_branch
    %11 = sbr.rel (0) target = $region9
  $region8: #{forward.16} parent=0 // pred_region
    _
  $region9: #{forward.16} parent=0 // pred_fallthru
    _
  // Predicated region
  $region10: #{forward.16} parent=0 // pred_check
    _
  $region11: #{forward.16} parent=0 // pred_check_branch
    %13 = sbr.rel (0) target = $region13
  $region12: #{forward.16} parent=0 // pred_region
    _
  $region13: #{forward.16} parent=0 // pred_fallthru
    _
  %v14 = vld [vmem:[%s0] sm:$0xff]
  %v15 = vld [vmem:[%s0 + $0x8] sm:$0xff]
  %v16 = vld [vmem:[%s1] sm:$0x1]
  %v17 = vld [vmem:[%s2] sm:$0x1]
  %vm18 = vcmask 261120
  %v19 = vsel %vm18, %v14, 0.0
  %20 = vadd.xlane.f32.xlu0 %v19
  %v21 = vpop.xlane.xlu0 %20
  %v22 = vsel %vm18, %v15, 0.0
  %23 = vadd.xlane.f32.xlu0 %v22
  %v24 = vpop.xlane.xlu0 %23
  %v25 = vrcp.pop 32.0
  %v26 = vmul.f32 %v21, %v25
  %v27 = vmul.f32 %v24, %v25
  %v28 = vsub.f32 %v14, %v26
  %v29 = vsub.f32 %v15, %v27
  %v30 = vmul.f32 %v28, %v28
  %v31 = vmul.f32 %v29, %v29
  %v32 = vsel %vm18, %v30, 0.0
  %33 = vadd.xlane.f32.xlu0 %v32
  %v34 = vpop.xlane.xlu0 %33
  %v35 = vsel %vm18, %v31, 0.0
  %36 = vadd.xlane.f32.xlu0 %v35
  %v37 = vpop.xlane.xlu0 %36
  %v38 = vmul.f32 %v34, %v25
  %v39 = vmul.f32 %v37, %v25
  %v40 = vadd.f32 %v38, 1e-12
  %v41 = vadd.f32 %v39, 1e-12
  %v42 = vrsqrt.pop %v40
  %v43 = vrsqrt.pop %v41
  %v44 = vmul.f32 %v28, %v42
  %v45 = vmul.f32 %v29, %v43
  %v47 = vlaneseq
  %v48 = vshrl.u32 %v47, 7
  %v49 = vsub.s32 0, %v48
  %v50 = vrot.slane %v16, %v49
  %v52 = vmul.f32 %v44, %v50
  %v53 = vmul.f32 %v45, %v50
  %v55 = vlaneseq
  %v56 = vshrl.u32 %v55, 7
  %v57 = vsub.s32 0, %v56
  %v58 = vrot.slane %v17, %v57
  %v60 = vadd.f32 %v52, %v58
  %v61 = vadd.f32 %v53, %v58
  %v62 = vpack.c.bf16 %v61, %v60
  %v64 = vunpack.c.l.b16 %v62
  %v65 = vunpack.c.h.b16 %v62
  %v66 = vpack.c.b16 %v64, %v64
  %v67 = vpack.c.b16 %v65, %v65
  %vm70 = vcmask 257024
  %71 = vst.msk [vmem:[%s3] sm:$0xf] %vm70, %v66
  %72 = vst.msk [vmem:[%s3 + $0x4] sm:$0xf] %vm70, %v67
  // Predicated region
  $region14: #{forward.16} parent=0 // pred_check
    _
  $region15: #{forward.16} parent=0 // pred_check_branch
    %74 = sbr.rel (0) target = $region17
  $region16: #{forward.16} parent=0 // pred_region
    _
  $region17: #{forward.16} parent=0 // pred_fallthru
    _
  // Predicated region
  $region18: #{forward.16} parent=0 // pred_check
    _
  $region19: #{forward.16} parent=0 // pred_check_branch
    %76 = sbr.rel (0) target = $region21
  $region20: #{forward.16} parent=0 // pred_region
    _
  $region21: #{forward.16} parent=0 // pred_fallthru
    _

// kernel: forward.18
$region0: #{forward.18}
  #allocation0 [shape = 'u32[]', space=smem, size = 0x4, offset = 0x4, fixed_abs, tag = 'smem constant byte address 0x4 - core index']
  #allocation1 [shape = 'u32[144,128]{1,0:T(1,128)}', space=vmem, size = 0x12000, scoped, tag = 'internal scratch']
  %s0 = inlined_call_operand.vmem [shape: bf16[2,8,96], index: 0, kind: input, shape index: {}]
  %s1 = inlined_call_operand.vmem [shape: f32[2,1,8], index: 1, kind: input, shape index: {}]
  %s2 = inlined_call_operand.vmem [shape: bf16[2,8,32], index: 2, kind: output, shape index: {}]
  %s3 = sld [smem:[#allocation0]]
  $region41: #{forward.18} parent=0
    _
  %s5 = ssub.s32 1, %s3
  %s6 = scalar_select 0, %s5, %s3
  loop: start=0, step=1, limit=4
  $region2: #{forward.18} parent=0 // loop_pre_header
    _
  $region3: #{forward.18} parent=0 // loop_header
    %s8 = sphi 0, %s12
    %p9 = scmp.ge.s32.totalorder %s8, 4
    %s18 = sphi 0, %s20
    %s21 = sphi 0, %s18
    %s22 = sphi 0, %s21
    %s38 = sphi 0, %s22
    %s44 = sphi 0, %s46
    %s47 = sphi 0, %s44
    %s48 = sphi 0, %s47
    %s64 = sphi 0, %s48
    %s70 = sphi 0, %s72
    %s73 = sphi 0, %s70
    %s74 = sphi 0, %s73
    %s90 = sphi 0, %s74
  $region4: #{forward.18} parent=0 // loop_header_branch
    %11 = sbr.rel (%p9) target = $region8
  $region5: #{forward.18} parent=0 // loop_body
    %s13 = ssub.s32 %s8, 1
    %s14 = ssub.s32 %s8, 2
    %s15 = sadd.s32 %s8, 1
    %s16 = ssub.s32 %s8, %s15
    %p17 = scmp.eq.s32.totalorder %s16, 0
    %s19 = sadd.s32 %s18, 1
    %s20 = scalar_select %p17, %s18, %s19
    %p23 = pneg %p17
    %p24 = scmp.eq.s32.totalorder %s8, 1
    %p25 = por %p23, %p24
    %p26 = scmp.ne.s32.totalorder %s18, %s21
    %p27 = scmp.eq.s32.totalorder %s8, 0
    %p28 = por %p26, %p27
    %p29 = scmp.ne.s32.totalorder %s18, %s21
    %p30 = scmp.eq.s32.totalorder %s13, 1
    %p31 = por %p29, %p30
    %p32 = scmp.ne.s32.totalorder %s21, %s22
    %p33 = scmp.eq.s32.totalorder %s13, 0
    %p34 = por %p32, %p33
    %p35 = scmp.ne.s32.totalorder %s21, %s22
    %p36 = scmp.eq.s32.totalorder %s14, 1
    %p37 = por %p35, %p36
    %p39 = scmp.ne.s32.totalorder %s22, %s38
    %p40 = scmp.eq.s32.totalorder %s14, 0
    %p41 = por %p39, %p40
    %s42 = ssub.s32 %s8, %s15
    %p43 = scmp.eq.s32.totalorder %s42, 0
    %s45 = sadd.s32 %s44, 1
    %s46 = scalar_select %p43, %s44, %s45
    %p49 = pneg %p43
    %p50 = scmp.eq.s32.totalorder %s8, 1
    %p51 = por %p49, %p50
    %p52 = scmp.ne.s32.totalorder %s44, %s47
    %p53 = scmp.eq.s32.totalorder %s8, 0
    %p54 = por %p52, %p53
    %p55 = scmp.ne.s32.totalorder %s44, %s47
    %p56 = scmp.eq.s32.totalorder %s13, 1
    %p57 = por %p55, %p56
    %p58 = scmp.ne.s32.totalorder %s47, %s48
    %p59 = scmp.eq.s32.totalorder %s13, 0
    %p60 = por %p58, %p59
    %p61 = scmp.ne.s32.totalorder %s47, %s48
    %p62 = scmp.eq.s32.totalorder %s14, 1
    %p63 = por %p61, %p62
    %p65 = scmp.ne.s32.totalorder %s48, %s64
    %p66 = scmp.eq.s32.totalorder %s14, 0
    %p67 = por %p65, %p66
    %s68 = ssub.s32 %s8, %s15
    %p69 = scmp.eq.s32.totalorder %s68, 0
    %s71 = sadd.s32 %s70, 1
    %s72 = scalar_select %p69, %s70, %s71
    %p75 = pneg %p69
    %p76 = scmp.eq.s32.totalorder %s8, 1
    %p77 = por %p75, %p76
    %p78 = scmp.ne.s32.totalorder %s70, %s73
    %p79 = scmp.eq.s32.totalorder %s8, 0
    %p80 = por %p78, %p79
    %p81 = scmp.ne.s32.totalorder %s70, %s73
    %p82 = scmp.eq.s32.totalorder %s13, 1
    %p83 = por %p81, %p82
    %p84 = scmp.ne.s32.totalorder %s73, %s74
    %p85 = scmp.eq.s32.totalorder %s13, 0
    %p86 = por %p84, %p85
    %p87 = scmp.ne.s32.totalorder %s73, %s74
    %p88 = scmp.eq.s32.totalorder %s14, 1
    %p89 = por %p87, %p88
    %p91 = scmp.ne.s32.totalorder %s74, %s90
    %p92 = scmp.eq.s32.totalorder %s14, 0
    %p93 = por %p91, %p92
    %p94 = scmp.le.s32.totalorder 1, %s8
    %p95 = scmp.lt.s32.totalorder %s8, 3
    %p96 = pnand %p94, %p95
    %p97 = pneg %p96
    // Predicated region
    $region9: #{forward.18} parent=5 // pred_check
      _
    $region10: #{forward.18} parent=5 // pred_check_branch
      %99 = sbr.rel (%p96) target = $region12
    $region11: #{forward.18} parent=5 // pred_region
      %s100 = ssub.s32 %s8, 1
    $region12: #{forward.18} parent=5 // pred_fallthru
      _
    %p101 = scmp.lt.s32.totalorder %s8, 2
    // Predicated region
    $region13: #{forward.18} parent=5 // pred_check
      %p102 = pneg %p101
    $region14: #{forward.18} parent=5 // pred_check_branch
      %104 = sbr.rel (%p102) target = $region16
    $region15: #{forward.18} parent=5 // pred_region
      // Predicated region
      $region17: #{forward.18} parent=15 // pred_check
        %p105 = pneg %p28
      $region18: #{forward.18} parent=15 // pred_check_branch
        %107 = sbr.rel (%p105) target = $region20
      $region19: #{forward.18} parent=15 // pred_region
        %p108 = scmp.lt.s32.totalorder %s8, 1
        %s109 = scalar_select %p108, %s8, 1
        %s110 = smul.addr %s109, 4
        %s111 = scalar_lea.vmem %s0, %s110
      $region20: #{forward.18} parent=15 // pred_fallthru
        _
      // Predicated region
      $region21: #{forward.18} parent=15 // pred_check
        %p112 = pneg %p54
      $region22: #{forward.18} parent=15 // pred_check_branch
        %114 = sbr.rel (%p112) target = $region24
      $region23: #{forward.18} parent=15 // pred_region
        %p115 = scmp.lt.s32.totalorder %s8, 1
        %s116 = scalar_select %p115, %s8, 1
        %s117 = scalar_lea.vmem %s1, %s116
      $region24: #{forward.18} parent=15 // pred_fallthru
        _
    $region16: #{forward.18} parent=5 // pred_fallthru
      _
    %p118 = scmp.le.s32.totalorder 1, %s8
    %p119 = scmp.lt.s32.totalorder %s8, 3
    %p120 = pnand %p118, %p119
    %p121 = pneg %p120
    // Predicated region
    $region25: #{forward.18} parent=5 // pred_check
      _
    $region26: #{forward.18} parent=5 // pred_check_branch
      %123 = sbr.rel (%p120) target = $region28
    $region27: #{forward.18} parent=5 // pred_region
      %s124 = ssub.s32 %s8, 1
      %p125 = scmp.lt.s32.totalorder %s13, 1
      %s126 = scalar_select %p125, %s13, 1
      %s127 = smul.addr %s126, 4
      %s128 = scalar_lea.vmem %s0, %s127
      %p129 = pneg %p34
      %p130 = pneg %p31
      %p131 = scmp.lt.s32.totalorder %s13, 1
      %s132 = scalar_select %p131, %s13, 1
      %s133 = scalar_lea.vmem %s1, %s132
      %p134 = pneg %p60
      %p135 = pneg %p57
      %p136 = pneg %p86
      %p137 = pneg %p83
      %p138 = scmp.lt.s32.totalorder %s13, 1
      %s139 = scalar_select %p138, %s13, 1
      %s140 = smul.addr %s139, 4
      %s141 = scalar_lea.vmem %s2, %s140
      %p142 = scmp.lt.s32.totalorder %s13, 1
      %s143 = scalar_select %p142, %s13, 1
      %s144 = smul.addr %s143, 4
      %s145 = scalar_lea.vmem %s0, %s144
      %p146 = scmp.lt.s32.totalorder %s13, 1
      %s147 = scalar_select %p146, %s13, 1
      %s148 = scalar_lea.vmem %s1, %s147
      %p149 = scmp.lt.s32.totalorder %s13, 1
      %s150 = scalar_select %p149, %s13, 1
      %s151 = smul.addr %s150, 4
      %s152 = scalar_lea.vmem %s2, %s151
      %v154 = vld [vmem:[%s145] sm:$0xf]
      %v155 = vld [vmem:[%s148] sm:$0x1]
      %v157 = vunpack.c.l.b16 %v154
      %v158 = vpack.c.b16 %v157, %v157
      %159 = vrot.lane.b32.xlu0 %v158, 96
      %v160 = vpop.permute.xlu0 %159
      %vm161 = vcmask 64512
      %v163 = vsel %vm161, %v154, 0
      %v166 = vsel %vm161, %v160, 0
      %168 = vmatprep.subr.bf16.mxu0 0
      %169 = vmatpush1.bf16.xpose.msra.mxu0 %v166
      %170 = vmatprep.subr.bf16.mxu0 0
      %171 = vmatpush1.bf16.xpose.msra.mxu0 0
      %172 = vmatprep.subr.bf16.mxu0 0
      %173 = vmatpush1.bf16.xpose.msra.mxu0 0
      %174 = vmatprep.subr.bf16.mxu0 0
      %175 = vmatpush1.bf16.xpose.msra.mxu0 0
      %176 = vmatprep.subr.bf16.mxu0 0
      %177 = vmatpush1.bf16.xpose.msra.mxu0 0
      %178 = vmatprep.subr.bf16.mxu0 0
      %179 = vmatpush1.bf16.xpose.msra.mxu0 0
      %180 = vmatprep.subr.bf16.mxu0 0
      %181 = vmatpush1.bf16.xpose.msra.mxu0 0
      %182 = vmatprep.subr.bf16.mxu0 0
      %183 = vmatpush1.bf16.xpose.msra.mxu0 0
      %184 = vmatprep.subr.bf16.mxu0 0
      %185 = vmatpush1.bf16.xpose.msra.mxu0 0
      %186 = vmatprep.subr.bf16.mxu0 0
      %187 = vmatpush1.bf16.xpose.msra.mxu0 0
      %188 = vmatprep.subr.bf16.mxu0 0
      %189 = vmatpush1.bf16.xpose.msra.mxu0 0
      %190 = vmatprep.subr.bf16.mxu0 0
      %191 = vmatpush1.bf16.xpose.msra.mxu0 0
      %192 = vmatprep.subr.bf16.mxu0 0
      %193 = vmatpush1.bf16.xpose.msra.mxu0 0
      %194 = vmatprep.subr.bf16.mxu0 0
      %195 = vmatpush1.bf16.xpose.msra.mxu0 0
      %196 = vmatprep.subr.bf16.mxu0 0
      %197 = vmatpush1.bf16.xpose.msra.mxu0 0
      %198 = vmatprep.subr.bf16.mxu0 0
      %199 = vmatpush1.bf16.xpose.msra.mxu0 0
      %200 = vmatprep.mubr.bf16.mxu0 0
      %201 = vmatmul.mubr.bf16.gmra.mrb[0].mxu0 %v163
      %v202 = vpop.f32.mrb[0].mxu0
      %v203 = vadd.f32 0.0, %v202
      %v204 = vpop.f32.mrb[0].mxu0
      %v205 = vpop.f32.mrb[0].mxu0
      %v206 = vpop.f32.mrb[0].mxu0
      %207 = vdwg.mxu0
      %v208 = vmul.f32 %v203, 0.35355338
      %v210 = vlaneseq
      %v211 = vshrl.u32 %v210, 7
      %v212 = vsub.s32 0, %v211
      %v213 = vrot.slane %v155, %v212
      %v215 = vadd.f32 %v208, %v213
      %v216 = vsel %vm161, %v215, -inf
      %217 = vmax.xlane.f32.xlu0 %v216
      %v218 = vpop.xlane.xlu0 %217
      %v219 = vsub.f32 %v215, %v218
      %v220 = vmul.f32 %v219, 1.442695
      %v221 = vpow.pop %v220
      %v222 = vsel %vm161, %v221, 0.0
      %223 = vadd.xlane.f32.xlu0 %v222
      %v224 = vpop.xlane.xlu0 %223
      %v225 = vrcp.pop %v224
      %v226 = vmul.f32 %v221, %v225
      %v227 = vpack.c.bf16 %v226, %v226
      %228 = vrot.lane.b32.xlu0 %v158, 64
      %v229 = vpop.permute.xlu0 %228
      %v231 = vsel %vm161, %v227, 0
      %vm233 = vcmask 1043456
      %v235 = vsel %vm233, %v229, 0
      %237 = vmatprep.subr.bf16.mxu0 0
      %238 = vmatpush1.bf16.msra.mxu0 %v235
      %239 = vmatprep.subr.bf16.mxu0 0
      %240 = vmatpush1.bf16.msra.mxu0 0
      %241 = vmatprep.subr.bf16.mxu0 0
      %242 = vmatpush1.bf16.msra.mxu0 0
      %243 = vmatprep.subr.bf16.mxu0 0
      %244 = vmatpush1.bf16.msra.mxu0 0
      %245 = vmatprep.subr.bf16.mxu0 0
      %246 = vmatpush1.bf16.msra.mxu0 0
      %247 = vmatprep.subr.bf16.mxu0 0
      %248 = vmatpush1.bf16.msra.mxu0 0
      %249 = vmatprep.subr.bf16.mxu0 0
      %250 = vmatpush1.bf16.msra.mxu0 0
      %251 = vmatprep.subr.bf16.mxu0 0
      %252 = vmatpush1.bf16.msra.mxu0 0
      %253 = vmatprep.subr.bf16.mxu0 0
      %254 = vmatpush1.bf16.msra.mxu0 0
      %255 = vmatprep.subr.bf16.mxu0 0
      %256 = vmatpush1.bf16.msra.mxu0 0
      %257 = vmatprep.subr.bf16.mxu0 0
      %258 = vmatpush1.bf16.msra.mxu0 0
      %259 = vmatprep.subr.bf16.mxu0 0
      %260 = vmatpush1.bf16.msra.mxu0 0
      %261 = vmatprep.subr.bf16.mxu0 0
      %262 = vmatpush1.bf16.msra.mxu0 0
      %263 = vmatprep.subr.bf16.mxu0 0
      %264 = vmatpush1.bf16.msra.mxu0 0
      %265 = vmatprep.subr.bf16.mxu0 0
      %266 = vmatpush1.bf16.msra.mxu0 0
      %267 = vmatprep.subr.bf16.mxu0 0
      %268 = vmatpush1.bf16.msra.mxu0 0
      %269 = vmatprep.mubr.bf16.mxu0 0
      %270 = vmatmul.mubr.bf16.gmra.mrb[0].mxu0 %v231
      %v271 = vpop.f32.mrb[0].mxu0
      %v272 = vadd.f32 0.0, %v271
      %v273 = vpop.f32.mrb[0].mxu0
      %v274 = vpop.f32.mrb[0].mxu0
      %v275 = vpop.f32.mrb[0].mxu0
      %276 = vdwg.mxu0
      %277 = vrot.lane.b32.xlu0 %v158, 120
      %v278 = vpop.permute.xlu0 %277
      %279 = vrot.lane.b32.xlu0 %v158, 88
      %v280 = vpop.permute.xlu0 %279
      %v282 = vsel %vm161, %v278, 0
      %v285 = vsel %vm161, %v280, 0
      %287 = vmatprep.subr.bf16.mxu0 0
      %288 = vmatpush1.bf16.xpose.msra.mxu0 %v285
      %289 = vmatprep.subr.bf16.mxu0 0
      %290 = vmatpush1.bf16.xpose.msra.mxu0 0
      %291 = vmatprep.subr.bf16.mxu0 0
      %292 = vmatpush1.bf16.xpose.msra.mxu0 0
      %293 = vmatprep.subr.bf16.mxu0 0
      %294 = vmatpush1.bf16.xpose.msra.mxu0 0
      %295 = vmatprep.subr.bf16.mxu0 0
      %296 = vmatpush1.bf16.xpose.msra.mxu0 0
      %297 = vmatprep.subr.bf16.mxu0 0
      %298 = vmatpush1.bf16.xpose.msra.mxu0 0
      %299 = vmatprep.subr.bf16.mxu0 0
      %300 = vmatpush1.bf16.xpose.msra.mxu0 0
      %301 = vmatprep.subr.bf16.mxu0 0
      %302 = vmatpush1.bf16.xpose.msra.mxu0 0
      %303 = vmatprep.subr.bf16.mxu0 0
      %304 = vmatpush1.bf16.xpose.msra.mxu0 0
      %305 = vmatprep.subr.bf16.mxu0 0
      %306 = vmatpush1.bf16.xpose.msra.mxu0 0
      %307 = vmatprep.subr.bf16.mxu0 0
      %308 = vmatpush1.bf16.xpose.msra.mxu0 0
      %309 = vmatprep.subr.bf16.mxu0 0
      %310 = vmatpush1.bf16.xpose.msra.mxu0 0
      %311 = vmatprep.subr.bf16.mxu0 0
      %312 = vmatpush1.bf16.xpose.msra.mxu0 0
      %313 = vmatprep.subr.bf16.mxu0 0
      %314 = vmatpush1.bf16.xpose.msra.mxu0 0
      %315 = vmatprep.subr.bf16.mxu0 0
      %316 = vmatpush1.bf16.xpose.msra.mxu0 0
      %317 = vmatprep.subr.bf16.mxu0 0
      %318 = vmatpush1.bf16.xpose.msra.mxu0 0
      %319 = vmatprep.mubr.bf16.mxu0 0
      %320 = vmatmul.mubr.bf16.gmra.mrb[0].mxu0 %v282
      %v321 = vpop.f32.mrb[0].mxu0
      %v322 = vadd.f32 0.0, %v321
      %v323 = vpop.f32.mrb[0].mxu0
      %v324 = vpop.f32.mrb[0].mxu0
      %v325 = vpop.f32.mrb[0].mxu0
      %326 = vdwg.mxu0
      %v327 = vmul.f32 %v322, 0.35355338
      %v328 = vadd.f32 %v327, %v213
      %v329 = vsel %vm161, %v328, -inf
      %330 = vmax.xlane.f32.xlu0 %v329
      %v331 = vpop.xlane.xlu0 %330
      %v332 = vsub.f32 %v328, %v331
      %v333 = vmul.f32 %v332, 1.442695
      %v334 = vpow.pop %v333
      %v335 = vsel %vm161, %v334, 0.0
      %336 = vadd.xlane.f32.xlu0 %v335
      %v337 = vpop.xlane.xlu0 %336
      %v338 = vrcp.pop %v337
      %v339 = vmul.f32 %v334, %v338
      %v340 = vpack.c.bf16 %v339, %v339
      %341 = vrot.lane.b32.xlu0 %v158, 56
      %v342 = vpop.permute.xlu0 %341
      %v344 = vsel %vm161, %v340, 0
      %v347 = vsel %vm233, %v342, 0
      %349 = vmatprep.subr.bf16.mxu0 0
      %350 = vmatpush1.bf16.msra.mxu0 %v347
      %351 = vmatprep.subr.bf16.mxu0 0
      %352 = vmatpush1.bf16.msra.mxu0 0
      %353 = vmatprep.subr.bf16.mxu0 0
      %354 = vmatpush1.bf16.msra.mxu0 0
      %355 = vmatprep.subr.bf16.mxu0 0
      %356 = vmatpush1.bf16.msra.mxu0 0
      %357 = vmatprep.subr.bf16.mxu0 0
      %358 = vmatpush1.bf16.msra.mxu0 0
      %359 = vmatprep.subr.bf16.mxu0 0
      %360 = vmatpush1.bf16.msra.mxu0 0
      %361 = vmatprep.subr.bf16.mxu0 0
      %362 = vmatpush1.bf16.msra.mxu0 0
      %363 = vmatprep.subr.bf16.mxu0 0
      %364 = vmatpush1.bf16.msra.mxu0 0
      %365 = vmatprep.subr.bf16.mxu0 0
      %366 = vmatpush1.bf16.msra.mxu0 0
      %367 = vmatprep.subr.bf16.mxu0 0
      %368 = vmatpush1.bf16.msra.mxu0 0
      %369 = vmatprep.subr.bf16.mxu0 0
      %370 = vmatpush1.bf16.msra.mxu0 0
      %371 = vmatprep.subr.bf16.mxu0 0
      %372 = vmatpush1.bf16.msra.mxu0 0
      %373 = vmatprep.subr.bf16.mxu0 0
      %374 = vmatpush1.bf16.msra.mxu0 0
      %375 = vmatprep.subr.bf16.mxu0 0
      %376 = vmatpush1.bf16.msra.mxu0 0
      %377 = vmatprep.subr.bf16.mxu0 0
      %378 = vmatpush1.bf16.msra.mxu0 0
      %379 = vmatprep.subr.bf16.mxu0 0
      %380 = vmatpush1.bf16.msra.mxu0 0
      %381 = vmatprep.mubr.bf16.mxu0 0
      %382 = vmatmul.mubr.bf16.gmra.mrb[0].mxu0 %v344
      %v383 = vpop.f32.mrb[0].mxu0
      %v384 = vadd.f32 0.0, %v383
      %v385 = vpop.f32.mrb[0].mxu0
      %v386 = vpop.f32.mrb[0].mxu0
      %v387 = vpop.f32.mrb[0].mxu0
      %388 = vdwg.mxu0
      %389 = vrot.lane.b32.xlu0 %v158, 112
      %v390 = vpop.permute.xlu0 %389
      %391 = vrot.lane.b32.xlu0 %v158, 80
      %v392 = vpop.permute.xlu0 %391
      %v394 = vsel %vm161, %v390, 0
      %v397 = vsel %vm161, %v392, 0
      %399 = vmatprep.subr.bf16.mxu0 0
      %400 = vmatpush1.bf16.xpose.msra.mxu0 %v397
      %401 = vmatprep.subr.bf16.mxu0 0
      %402 = vmatpush1.bf16.xpose.msra.mxu0 0
      %403 = vmatprep.subr.bf16.mxu0 0
      %404 = vmatpush1.bf16.xpose.msra.mxu0 0
      %405 = vmatprep.subr.bf16.mxu0 0
      %406 = vmatpush1.bf16.xpose.msra.mxu0 0
      %407 = vmatprep.subr.bf16.mxu0 0
      %408 = vmatpush1.bf16.xpose.msra.mxu0 0
      %409 = vmatprep.subr.bf16.mxu0 0
      %410 = vmatpush1.bf16.xpose.msra.mxu0 0
      %411 = vmatprep.subr.bf16.mxu0 0
      %412 = vmatpush1.bf16.xpose.msra.mxu0 0
      %413 = vmatprep.subr.bf16.mxu0 0
      %414 = vmatpush1.bf16.xpose.msra.mxu0 0
      %415 = vmatprep.subr.bf16.mxu0 0
      %416 = vmatpush1.bf16.xpose.msra.mxu0 0
      %417 = vmatprep.subr.bf16.mxu0 0
      %418 = vmatpush1.bf16.xpose.msra.mxu0 0
      %419 = vmatprep.subr.bf16.mxu0 0
      %420 = vmatpush1.bf16.xpose.msra.mxu0 0
      %421 = vmatprep.subr.bf16.mxu0 0
      %422 = vmatpush1.bf16.xpose.msra.mxu0 0
      %423 = vmatprep.subr.bf16.mxu0 0
      %424 = vmatpush1.bf16.xpose.msra.mxu0 0
      %425 = vmatprep.subr.bf16.mxu0 0
      %426 = vmatpush1.bf16.xpose.msra.mxu0 0
      %427 = vmatprep.subr.bf16.mxu0 0
      %428 = vmatpush1.bf16.xpose.msra.mxu0 0
      %429 = vmatprep.subr.bf16.mxu0 0
      %430 = vmatpush1.bf16.xpose.msra.mxu0 0
      %431 = vmatprep.mubr.bf16.mxu0 0
      %432 = vmatmul.mubr.bf16.gmra.mrb[0].mxu0 %v394
      %v433 = vpop.f32.mrb[0].mxu0
      %v434 = vadd.f32 0.0, %v433
      %v435 = vpop.f32.mrb[0].mxu0
      %v436 = vpop.f32.mrb[0].mxu0
      %v437 = vpop.f32.mrb[0].mxu0
      %438 = vdwg.mxu0
      %v439 = vmul.f32 %v434, 0.35355338
      %v440 = vadd.f32 %v439, %v213
      %v441 = vsel %vm161, %v440, -inf
      %442 = vmax.xlane.f32.xlu0 %v441
      %v443 = vpop.xlane.xlu0 %442
      %v444 = vsub.f32 %v440, %v443
      %v445 = vmul.f32 %v444, 1.442695
      %v446 = vpow.pop %v445
      %v447 = vsel %vm161, %v446, 0.0
      %448 = vadd.xlane.f32.xlu0 %v447
      %v449 = vpop.xlane.xlu0 %448
      %v450 = vrcp.pop %v449
      %v451 = vmul.f32 %v446, %v450
      %v452 = vpack.c.bf16 %v451, %v451
      %453 = vrot.lane.b32.xlu0 %v158, 48
      %v454 = vpop.permute.xlu0 %453
      %v456 = vsel %vm161, %v452, 0
      %v459 = vsel %vm233, %v454, 0
      %461 = vmatprep.subr.bf16.mxu0 0
      %462 = vmatpush1.bf16.msra.mxu0 %v459
      %463 = vmatprep.subr.bf16.mxu0 0
      %464 = vmatpush1.bf16.msra.mxu0 0
      %465 = vmatprep.subr.bf16.mxu0 0
      %466 = vmatpush1.bf16.msra.mxu0 0
      %467 = vmatprep.subr.bf16.mxu0 0
      %468 = vmatpush1.bf16.msra.mxu0 0
      %469 = vmatprep.subr.bf16.mxu0 0
      %470 = vmatpush1.bf16.msra.mxu0 0
      %471 = vmatprep.subr.bf16.mxu0 0
      %472 = vmatpush1.bf16.msra.mxu0 0
      %473 = vmatprep.subr.bf16.mxu0 0
      %474 = vmatpush1.bf16.msra.mxu0 0
      %475 = vmatprep.subr.bf16.mxu0 0
      %476 = vmatpush1.bf16.msra.mxu0 0
      %477 = vmatprep.subr.bf16.mxu0 0
      %478 = vmatpush1.bf16.msra.mxu0 0
      %479 = vmatprep.subr.bf16.mxu0 0
      %480 = vmatpush1.bf16.msra.mxu0 0
      %481 = vmatprep.subr.bf16.mxu0 0
      %482 = vmatpush1.bf16.msra.mxu0 0
      %483 = vmatprep.subr.bf16.mxu0 0
      %484 = vmatpush1.bf16.msra.mxu0 0
      %485 = vmatprep.subr.bf16.mxu0 0
      %486 = vmatpush1.bf16.msra.mxu0 0
      %487 = vmatprep.subr.bf16.mxu0 0
      %488 = vmatpush1.bf16.msra.mxu0 0
      %489 = vmatprep.subr.bf16.mxu0 0
      %490 = vmatpush1.bf16.msra.mxu0 0
      %491 = vmatprep.subr.bf16.mxu0 0
      %492 = vmatpush1.bf16.msra.mxu0 0
      %493 = vmatprep.mubr.bf16.mxu0 0
      %494 = vmatmul.mubr.bf16.gmra.mrb[0].mxu0 %v456
      %v495 = vpop.f32.mrb[0].mxu0
      %v496 = vadd.f32 0.0, %v495
      %v497 = vpop.f32.mrb[0].mxu0
      %v498 = vpop.f32.mrb[0].mxu0
      %v499 = vpop.f32.mrb[0].mxu0
      %500 = vdwg.mxu0
      %501 = vrot.lane.b32.xlu0 %v158, 104
      %v502 = vpop.permute.xlu0 %501
      %503 = vrot.lane.b32.xlu0 %v158, 72
      %v504 = vpop.permute.xlu0 %503
      %v506 = vsel %vm161, %v502, 0
      %v509 = vsel %vm161, %v504, 0
      %511 = vmatprep.subr.bf16.mxu0 0
      %512 = vmatpush1.bf16.xpose.msra.mxu0 %v509
      %513 = vmatprep.subr.bf16.mxu0 0
      %514 = vmatpush1.bf16.xpose.msra.mxu0 0
      %515 = vmatprep.subr.bf16.mxu0 0
      %516 = vmatpush1.bf16.xpose.msra.mxu0 0
      %517 = vmatprep.subr.bf16.mxu0 0
      %518 = vmatpush1.bf16.xpose.msra.mxu0 0
      %519 = vmatprep.subr.bf16.mxu0 0
      %520 = vmatpush1.bf16.xpose.msra.mxu0 0
      %521 = vmatprep.subr.bf16.mxu0 0
      %522 = vmatpush1.bf16.xpose.msra.mxu0 0
      %523 = vmatprep.subr.bf16.mxu0 0
      %524 = vmatpush1.bf16.xpose.msra.mxu0 0
      %525 = vmatprep.subr.bf16.mxu0 0
      %526 = vmatpush1.bf16.xpose.msra.mxu0 0
      %527 = vmatprep.subr.bf16.mxu0 0
      %528 = vmatpush1.bf16.xpose.msra.mxu0 0
      %529 = vmatprep.subr.bf16.mxu0 0
      %530 = vmatpush1.bf16.xpose.msra.mxu0 0
      %531 = vmatprep.subr.bf16.mxu0 0
      %532 = vmatpush1.bf16.xpose.msra.mxu0 0
      %533 = vmatprep.subr.bf16.mxu0 0
      %534 = vmatpush1.bf16.xpose.msra.mxu0 0
      %535 = vmatprep.subr.bf16.mxu0 0
      %536 = vmatpush1.bf16.xpose.msra.mxu0 0
      %537 = vmatprep.subr.bf16.mxu0 0
      %538 = vmatpush1.bf16.xpose.msra.mxu0 0
      %539 = vmatprep.subr.bf16.mxu0 0
      %540 = vmatpush1.bf16.xpose.msra.mxu0 0
      %541 = vmatprep.subr.bf16.mxu0 0
      %542 = vmatpush1.bf16.xpose.msra.mxu0 0
      %543 = vmatprep.mubr.bf16.mxu0 0
      %544 = vmatmul.mubr.bf16.gmra.mrb[0].mxu0 %v506
      %v545 = vpop.f32.mrb[0].mxu0
      %v546 = vadd.f32 0.0, %v545
      %v547 = vpop.f32.mrb[0].mxu0
      %v548 = vpop.f32.mrb[0].mxu0
      %v549 = vpop.f32.mrb[0].mxu0
      %550 = vdwg.mxu0
      %v551 = vmul.f32 %v546, 0.35355338
      %v552 = vadd.f32 %v551, %v213
      %v553 = vsel %vm161, %v552, -inf
      %554 = vmax.xlane.f32.xlu0 %v553
      %v555 = vpop.xlane.xlu0 %554
      %v556 = vsub.f32 %v552, %v555
      %v557 = vmul.f32 %v556, 1.442695
      %v558 = vpow.pop %v557
      %v559 = vsel %vm161, %v558, 0.0
      %560 = vadd.xlane.f32.xlu0 %v559
      %v561 = vpop.xlane.xlu0 %560
      %v562 = vrcp.pop %v561
      %v563 = vmul.f32 %v558, %v562
      %v564 = vpack.c.bf16 %v563, %v563
      %565 = vrot.lane.b32.xlu0 %v158, 40
      %v566 = vpop.permute.xlu0 %565
      %v568 = vsel %vm161, %v564, 0
      %v571 = vsel %vm233, %v566, 0
      %573 = vmatprep.subr.bf16.mxu0 0
      %574 = vmatpush1.bf16.msra.mxu0 %v571
      %575 = vmatprep.subr.bf16.mxu0 0
      %576 = vmatpush1.bf16.msra.mxu0 0
      %577 = vmatprep.subr.bf16.mxu0 0
      %578 = vmatpush1.bf16.msra.mxu0 0
      %579 = vmatprep.subr.bf16.mxu0 0
      %580 = vmatpush1.bf16.msra.mxu0 0
      %581 = vmatprep.subr.bf16.mxu0 0
      %582 = vmatpush1.bf16.msra.mxu0 0
      %583 = vmatprep.subr.bf16.mxu0 0
      %584 = vmatpush1.bf16.msra.mxu0 0
      %585 = vmatprep.subr.bf16.mxu0 0
      %586 = vmatpush1.bf16.msra.mxu0 0
      %587 = vmatprep.subr.bf16.mxu0 0
      %588 = vmatpush1.bf16.msra.mxu0 0
      %589 = vmatprep.subr.bf16.mxu0 0
      %590 = vmatpush1.bf16.msra.mxu0 0
      %591 = vmatprep.subr.bf16.mxu0 0
      %592 = vmatpush1.bf16.msra.mxu0 0
      %593 = vmatprep.subr.bf16.mxu0 0
      %594 = vmatpush1.bf16.msra.mxu0 0
      %595 = vmatprep.subr.bf16.mxu0 0
      %596 = vmatpush1.bf16.msra.mxu0 0
      %597 = vmatprep.subr.bf16.mxu0 0
      %598 = vmatpush1.bf16.msra.mxu0 0
      %599 = vmatprep.subr.bf16.mxu0 0
      %600 = vmatpush1.bf16.msra.mxu0 0
      %601 = vmatprep.subr.bf16.mxu0 0
      %602 = vmatpush1.bf16.msra.mxu0 0
      %603 = vmatprep.subr.bf16.mxu0 0
      %604 = vmatpush1.bf16.msra.mxu0 0
      %605 = vmatprep.mubr.bf16.mxu0 0
      %606 = vmatmul.mubr.bf16.gmra.mrb[0].mxu0 %v568
      %v607 = vpop.f32.mrb[0].mxu0
      %v608 = vadd.f32 0.0, %v607
      %v609 = vpop.f32.mrb[0].mxu0
      %v610 = vpop.f32.mrb[0].mxu0
      %v611 = vpop.f32.mrb[0].mxu0
      %612 = vdwg.mxu0
      %614 = vrot.lane.b32.xlu0 %v384, 8
      %v615 = vpop.permute.xlu0 %614
      %618 = vrot.lane.b32.xlu0 %v496, 16
      %v619 = vpop.permute.xlu0 %618
      %622 = vrot.lane.b32.xlu0 %v608, 24
      %v623 = vpop.permute.xlu0 %622
      %v625 = vsel %vm161, %v272, %v615
      %vm626 = vcmask 130048
      %v627 = vsel %vm626, %v625, %v619
      %vm628 = vcmask 195584
      %v629 = vsel %vm628, %v627, %v623
      %v630 = vpack.c.bf16 %v629, %v629
      %vm631 = vcmask 257024
      %632 = vst.msk [vmem:[%s152] sm:$0xf] %vm631, %v630
      %p633 = scmp.lt.s32.totalorder %s13, 1
      %s634 = scalar_select %p633, %s13, 1
      %s635 = smul.addr %s634, 4
      %s636 = scalar_lea.vmem %s2, %s635
      // Predicated region
      $region29: #{forward.18} parent=27 // pred_check
        %p637 = pneg %p83
      $region30: #{forward.18} parent=27 // pred_check_branch
        %639 = sbr.rel (%p637) target = $region32
      $region31: #{forward.18} parent=27 // pred_region
        _
      $region32: #{forward.18} parent=27 // pred_fallthru
        _
    $region28: #{forward.18} parent=5 // pred_fallthru
      _
    %p640 = scmp.le.s32.totalorder 2, %s8
    // Predicated region
    $region33: #{forward.18} parent=5 // pred_check
      %p641 = pneg %p640
    $region34: #{forward.18} parent=5 // pred_check_branch
      %643 = sbr.rel (%p641) target = $region36
    $region35: #{forward.18} parent=5 // pred_region
      %s644 = ssub.s32 %s8, 2
      // Predicated region
      $region37: #{forward.18} parent=35 // pred_check
        %p645 = pneg %p89
      $region38: #{forward.18} parent=35 // pred_check_branch
        %647 = sbr.rel (%p645) target = $region40
      $region39: #{forward.18} parent=35 // pred_region
        %p648 = scmp.lt.s32.totalorder %s14, 1
        %s649 = scalar_select %p648, %s14, 1
        %s650 = smul.addr %s649, 4
        %s651 = scalar_lea.vmem %s2, %s650
      $region40: #{forward.18} parent=35 // pred_fallthru
        _
    $region36: #{forward.18} parent=5 // pred_fallthru
      _
  $region6: #{forward.18} parent=0 // loop_footer
    %s12 = sadd.s32 1, %s8
  $region7: #{forward.18} parent=0 // loop_footer_branch
    %7 = sbr.rel target = $region3
  $region8: #{forward.18} parent=0 // loop_exit
    _

// kernel: forward.21
$region0: #{forward.21}
  #allocation0 [shape = 'u32[]', space=smem, size = 0x4, offset = 0x4, fixed_abs, tag = 'smem constant byte address 0x4 - core index']
  #allocation1 [shape = 'u32[144,128]{1,0:T(1,128)}', space=vmem, size = 0x12000, scoped, tag = 'internal scratch']
  #allocation2 [shape = 'f32[16,64]{1,0:T(8,128)}', space=vmem, size = 0x2000, scoped, tag = 'scratch operand']
  %s0 = inlined_call_operand.vmem [shape: bf16[16,32], index: 0, kind: input, shape index: {}]
  %s1 = inlined_call_operand.vmem [shape: bf16[32,64], index: 1, kind: input, shape index: {}]
  %s2 = inlined_call_operand.vmem [shape: f32[1,64], index: 2, kind: input, shape index: {}]
  %s3 = inlined_call_operand.vmem [shape: bf16[16,64], index: 3, kind: output, shape index: {}]
  %s4 = sld [smem:[#allocation0]]
  $region30: #{forward.21} parent=0
    _
  %s6 = ssub.s32 1, %s4
  %s7 = scalar_select 0, %s6, %s4
  // Predicated region
  $region2: #{forward.21} parent=0 // pred_check
    _
  $region3: #{forward.21} parent=0 // pred_check_branch
    %9 = sbr.rel (0) target = $region5
  $region4: #{forward.21} parent=0 // pred_region
    _
  $region5: #{forward.21} parent=0 // pred_fallthru
    _
  // Predicated region
  $region6: #{forward.21} parent=0 // pred_check
    _
  $region7: #{forward.21} parent=0 // pred_check_branch
    %11 = sbr.rel (0) target = $region9
  $region8: #{forward.21} parent=0 // pred_region
    _
  $region9: #{forward.21} parent=0 // pred_fallthru
    _
  // Predicated region
  $region10: #{forward.21} parent=0 // pred_check
    _
  $region11: #{forward.21} parent=0 // pred_check_branch
    %13 = sbr.rel (0) target = $region13
  $region12: #{forward.21} parent=0 // pred_region
    _
  $region13: #{forward.21} parent=0 // pred_fallthru
    _
  %p15 = scmp.eq.s32.totalorder 0, 0
  // Predicated region
  $region14: #{forward.21} parent=0 // pred_check
    %p16 = pneg %p15
  $region15: #{forward.21} parent=0 // pred_check_branch
    %18 = sbr.rel (%p16) target = $region17
  $region16: #{forward.21} parent=0 // pred_region
    %vm19 = vcmask 523264
    %20 = vst.msk [vmem:[#allocation2] sm:$0xff] %vm19, 0.0
    %21 = vst.msk [vmem:[#allocation2 + $0x8] sm:$0xff] %vm19, 0.0
  $region17: #{forward.21} parent=0 // pred_fallthru
    _
  %v22 = vld [vmem:[#allocation2] sm:$0xff]
  %v23 = vld [vmem:[#allocation2 + $0x8] sm:$0xff]
  %v24 = vld [vmem:[%s0] sm:$0xf]
  %v25 = vld [vmem:[%s0 + $0x4] sm:$0xf]
  %v26 = vld [vmem:[%s1] sm:$0xf]
  %v27 = vld [vmem:[%s1 + $0x4] sm:$0xf]
  %v28 = vld [vmem:[%s1 + $0x8] sm:$0xf]
  %v29 = vld [vmem:[%s1 + $0xc] sm:$0xf]
  %v32 = vunpack.c.l.b16 %v24
  %v33 = vunpack.c.l.b16 %v25
  %v34 = vpack.c.b16 %v33, %v32
  %v39 = vunpack.c.l.b16 %v26
  %v40 = vunpack.c.l.b16 %v27
  %v41 = vunpack.c.l.b16 %v28
  %v42 = vunpack.c.l.b16 %v29
  %v43 = vpack.c.b16 %v40, %v39
  %v44 = vpack.c.b16 %v42, %v41
  %vm47 = vcmask 261120
  %v49 = vsel %vm47, %v34, 0
  %51 = vmatprep.subr.bf16.mxu0 0
  %52 = vmatpush1.bf16.msra.mxu0 %v43
  %53 = vmatprep.subr.bf16.mxu0 0
  %54 = vmatpush1.bf16.msra.mxu0 %v44
  %55 = vmatprep.subr.bf16.mxu0 0
  %56 = vmatpush1.bf16.msra.mxu0 0
  %57 = vmatprep.subr.bf16.mxu0 0
  %58 = vmatpush1.bf16.msra.mxu0 0
  %59 = vmatprep.subr.bf16.mxu0 0
  %60 = vmatpush1.bf16.msra.mxu0 0
  %61 = vmatprep.subr.bf16.mxu0 0
  %62 = vmatpush1.bf16.msra.mxu0 0
  %63 = vmatprep.subr.bf16.mxu0 0
  %64 = vmatpush1.bf16.msra.mxu0 0
  %65 = vmatprep.subr.bf16.mxu0 0
  %66 = vmatpush1.bf16.msra.mxu0 0
  %67 = vmatprep.subr.bf16.mxu0 0
  %68 = vmatpush1.bf16.msra.mxu0 0
  %69 = vmatprep.subr.bf16.mxu0 0
  %70 = vmatpush1.bf16.msra.mxu0 0
  %71 = vmatprep.subr.bf16.mxu0 0
  %72 = vmatpush1.bf16.msra.mxu0 0
  %73 = vmatprep.subr.bf16.mxu0 0
  %74 = vmatpush1.bf16.msra.mxu0 0
  %75 = vmatprep.subr.bf16.mxu0 0
  %76 = vmatpush1.bf16.msra.mxu0 0
  %77 = vmatprep.subr.bf16.mxu0 0
  %78 = vmatpush1.bf16.msra.mxu0 0
  %79 = vmatprep.subr.bf16.mxu0 0
  %80 = vmatpush1.bf16.msra.mxu0 0
  %81 = vmatprep.subr.bf16.mxu0 0
  %82 = vmatpush1.bf16.msra.mxu0 0
  %83 = vmatprep.mubr.bf16.mxu0 0
  %84 = vmatmul.mubr.bf16.gmra.mrb[0].mxu0 %v49
  %v85 = vpop.f32.mrb[0].mxu0
  %v86 = vadd.f32 0.0, %v85
  %v87 = vpop.f32.mrb[0].mxu0
  %v88 = vpop.f32.mrb[0].mxu0
  %v89 = vadd.f32 0.0, %v88
  %v90 = vpop.f32.mrb[0].mxu0
  %91 = vdwg.mxu0
  %v92 = vadd.f32 %v22, %v86
  %v93 = vadd.f32 %v23, %v89
  %vm94 = vcmask 523264
  %95 = vst.msk [vmem:[#allocation2] sm:$0xff] %vm94, %v92
  %96 = vst.msk [vmem:[#allocation2 + $0x8] sm:$0xff] %vm94, %v93
  // Predicated region
  $region18: #{forward.21} parent=0 // pred_check
    %p97 = pneg %p15
  $region19: #{forward.21} parent=0 // pred_check_branch
    %99 = sbr.rel (%p97) target = $region21
  $region20: #{forward.21} parent=0 // pred_region
    %v100 = vld [vmem:[#allocation2] sm:$0xff]
    %v101 = vld [vmem:[#allocation2 + $0x8] sm:$0xff]
    %v102 = vld [vmem:[%s2] sm:$0x1]
    %v104 = vlaneseq
    %v105 = vshrl.u32 %v104, 7
    %v106 = vsub.s32 0, %v105
    %v107 = vrot.slane %v102, %v106
    %v109 = vadd.f32 %v100, %v107
    %v110 = vadd.f32 %v101, %v107
    %v111 = vmul.f32 %v109, 0.5
    %v112 = vmul.f32 %v110, 0.5
    %v113 = vmul.f32 %v109, 0.70710677
    %v114 = vmul.f32 %v110, 0.70710677
    %v115 = verf.f32.pop %v113
    %v116 = verf.f32.pop %v114
    %v117 = vadd.f32 %v115, 1.0
    %v118 = vadd.f32 %v116, 1.0
    %v119 = vmul.f32 %v111, %v117
    %v120 = vmul.f32 %v112, %v118
    %v121 = vpack.c.bf16 %v120, %v119
    %v123 = vunpack.c.l.b16 %v121
    %v124 = vunpack.c.h.b16 %v121
    %v125 = vpack.c.b16 %v123, %v123
    %v126 = vpack.c.b16 %v124, %v124
    %vm129 = vcmask 519168
    %130 = vst.msk [vmem:[%s3] sm:$0xf] %vm129, %v125
    %131 = vst.msk [vmem:[%s3 + $0x4] sm:$0xf] %vm129, %v126
  $region21: #{forward.21} parent=0 // pred_fallthru
    _
  // Predicated region
  $region22: #{forward.21} parent=0 // pred_check
    _
  $region23: #{forward.21} parent=0 // pred_check_branch
    %133 = sbr.rel (0) target = $region25
  $region24: #{forward.21} parent=0 // pred_region
    _
  $region25: #{forward.21} parent=0 // pred_fallthru
    _
  // Predicated region
  $region26: #{forward.21} parent=0 // pred_check
    _
  $region27: #{forward.21} parent=0 // pred_check_branch
    %135 = sbr.rel (0) target = $region29
  $region28: #{forward.21} parent=0 // pred_region
    _
  $region29: #{forward.21} parent=0 // pred_fallthru
    _

// kernel: forward.22
$region0: #{forward.22}
  #allocation0 [shape = 'u32[]', space=smem, size = 0x4, offset = 0x4, fixed_abs, tag = 'smem constant byte address 0x4 - core index']
  #allocation1 [shape = 'u32[144,128]{1,0:T(1,128)}', space=vmem, size = 0x12000, scoped, tag = 'internal scratch']
  #allocation2 [shape = 'f32[16,32]{1,0:T(8,128)}', space=vmem, size = 0x2000, scoped, tag = 'scratch operand']
  %s0 = inlined_call_operand.vmem [shape: bf16[16,64], index: 0, kind: input, shape index: {}]
  %s1 = inlined_call_operand.vmem [shape: bf16[64,32], index: 1, kind: input, shape index: {}]
  %s2 = inlined_call_operand.vmem [shape: f32[1,32], index: 2, kind: input, shape index: {}]
  %s3 = inlined_call_operand.vmem [shape: bf16[16,32], index: 3, kind: output, shape index: {}]
  %s4 = sld [smem:[#allocation0]]
  $region30: #{forward.22} parent=0
    _
  %s6 = ssub.s32 1, %s4
  %s7 = scalar_select 0, %s6, %s4
  // Predicated region
  $region2: #{forward.22} parent=0 // pred_check
    _
  $region3: #{forward.22} parent=0 // pred_check_branch
    %9 = sbr.rel (0) target = $region5
  $region4: #{forward.22} parent=0 // pred_region
    _
  $region5: #{forward.22} parent=0 // pred_fallthru
    _
  // Predicated region
  $region6: #{forward.22} parent=0 // pred_check
    _
  $region7: #{forward.22} parent=0 // pred_check_branch
    %11 = sbr.rel (0) target = $region9
  $region8: #{forward.22} parent=0 // pred_region
    _
  $region9: #{forward.22} parent=0 // pred_fallthru
    _
  // Predicated region
  $region10: #{forward.22} parent=0 // pred_check
    _
  $region11: #{forward.22} parent=0 // pred_check_branch
    %13 = sbr.rel (0) target = $region13
  $region12: #{forward.22} parent=0 // pred_region
    _
  $region13: #{forward.22} parent=0 // pred_fallthru
    _
  %p15 = scmp.eq.s32.totalorder 0, 0
  // Predicated region
  $region14: #{forward.22} parent=0 // pred_check
    %p16 = pneg %p15
  $region15: #{forward.22} parent=0 // pred_check_branch
    %18 = sbr.rel (%p16) target = $region17
  $region16: #{forward.22} parent=0 // pred_region
    %vm19 = vcmask 261120
    %20 = vst.msk [vmem:[#allocation2] sm:$0xff] %vm19, 0.0
    %21 = vst.msk [vmem:[#allocation2 + $0x8] sm:$0xff] %vm19, 0.0
  $region17: #{forward.22} parent=0 // pred_fallthru
    _
  %v22 = vld [vmem:[#allocation2] sm:$0xff]
  %v23 = vld [vmem:[#allocation2 + $0x8] sm:$0xff]
  %v24 = vld [vmem:[%s0] sm:$0xf]
  %v25 = vld [vmem:[%s0 + $0x4] sm:$0xf]
  %v26 = vld [vmem:[%s1] sm:$0xf]
  %v27 = vld [vmem:[%s1 + $0x4] sm:$0xf]
  %v28 = vld [vmem:[%s1 + $0x8] sm:$0xf]
  %v29 = vld [vmem:[%s1 + $0xc] sm:$0xf]
  %v30 = vld [vmem:[%s1 + $0x10] sm:$0xf]
  %v31 = vld [vmem:[%s1 + $0x14] sm:$0xf]
  %v32 = vld [vmem:[%s1 + $0x18] sm:$0xf]
  %v33 = vld [vmem:[%s1 + $0x1c] sm:$0xf]
  %v36 = vunpack.c.l.b16 %v24
  %v37 = vunpack.c.l.b16 %v25
  %v38 = vpack.c.b16 %v37, %v36
  %v47 = vunpack.c.l.b16 %v26
  %v48 = vunpack.c.l.b16 %v27
  %v49 = vunpack.c.l.b16 %v28
  %v50 = vunpack.c.l.b16 %v29
  %v51 = vunpack.c.l.b16 %v30
  %v52 = vunpack.c.l.b16 %v31
  %v53 = vunpack.c.l.b16 %v32
  %v54 = vunpack.c.l.b16 %v33
  %v55 = vpack.c.b16 %v48, %v47
  %v56 = vpack.c.b16 %v50, %v49
  %v57 = vpack.c.b16 %v52, %v51
  %v58 = vpack.c.b16 %v54, %v53
  %vm63 = vcmask 523264
  %v65 = vsel %vm63, %v38, 0
  %67 = vmatprep.subr.bf16.mxu0 0
  %68 = vmatpush1.bf16.msra.mxu0 %v55
  %69 = vmatprep.subr.bf16.mxu0 0
  %70 = vmatpush1.bf16.msra.mxu0 %v56
  %71 = vmatprep.subr.bf16.mxu0 0
  %72 = vmatpush1.bf16.msra.mxu0 %v57
  %73 = vmatprep.subr.bf16.mxu0 0
  %74 = vmatpush1.bf16.msra.mxu0 %v58
  %75 = vmatprep.subr.bf16.mxu0 0
  %76 = vmatpush1.bf16.msra.mxu0 0
  %77 = vmatprep.subr.bf16.mxu0 0
  %78 = vmatpush1.bf16.msra.mxu0 0
  %79 = vmatprep.subr.bf16.mxu0 0
  %80 = vmatpush1.bf16.msra.mxu0 0
  %81 = vmatprep.subr.bf16.mxu0 0
  %82 = vmatpush1.bf16.msra.mxu0 0
  %83 = vmatprep.subr.bf16.mxu0 0
  %84 = vmatpush1.bf16.msra.mxu0 0
  %85 = vmatprep.subr.bf16.mxu0 0
  %86 = vmatpush1.bf16.msra.mxu0 0
  %87 = vmatprep.subr.bf16.mxu0 0
  %88 = vmatpush1.bf16.msra.mxu0 0
  %89 = vmatprep.subr.bf16.mxu0 0
  %90 = vmatpush1.bf16.msra.mxu0 0
  %91 = vmatprep.subr.bf16.mxu0 0
  %92 = vmatpush1.bf16.msra.mxu0 0
  %93 = vmatprep.subr.bf16.mxu0 0
  %94 = vmatpush1.bf16.msra.mxu0 0
  %95 = vmatprep.subr.bf16.mxu0 0
  %96 = vmatpush1.bf16.msra.mxu0 0
  %97 = vmatprep.subr.bf16.mxu0 0
  %98 = vmatpush1.bf16.msra.mxu0 0
  %99 = vmatprep.mubr.bf16.mxu0 0
  %100 = vmatmul.mubr.bf16.gmra.mrb[0].mxu0 %v65
  %v101 = vpop.f32.mrb[0].mxu0
  %v102 = vadd.f32 0.0, %v101
  %v103 = vpop.f32.mrb[0].mxu0
  %v104 = vpop.f32.mrb[0].mxu0
  %v105 = vadd.f32 0.0, %v104
  %v106 = vpop.f32.mrb[0].mxu0
  %107 = vdwg.mxu0
  %v108 = vadd.f32 %v22, %v102
  %v109 = vadd.f32 %v23, %v105
  %vm110 = vcmask 261120
  %111 = vst.msk [vmem:[#allocation2] sm:$0xff] %vm110, %v108
  %112 = vst.msk [vmem:[#allocation2 + $0x8] sm:$0xff] %vm110, %v109
  // Predicated region
  $region18: #{forward.22} parent=0 // pred_check
    %p113 = pneg %p15
  $region19: #{forward.22} parent=0 // pred_check_branch
    %115 = sbr.rel (%p113) target = $region21
  $region20: #{forward.22} parent=0 // pred_region
    %v116 = vld [vmem:[#allocation2] sm:$0xff]
    %v117 = vld [vmem:[#allocation2 + $0x8] sm:$0xff]
    %v118 = vld [vmem:[%s2] sm:$0x1]
    %v120 = vlaneseq
    %v121 = vshrl.u32 %v120, 7
    %v122 = vsub.s32 0, %v121
    %v123 = vrot.slane %v118, %v122
    %v125 = vadd.f32 %v116, %v123
    %v126 = vadd.f32 %v117, %v123
    %v127 = vpack.c.bf16 %v126, %v125
    %v129 = vunpack.c.l.b16 %v127
    %v130 = vunpack.c.h.b16 %v127
    %v131 = vpack.c.b16 %v129, %v129
    %v132 = vpack.c.b16 %v130, %v130
    %vm135 = vcmask 257024
    %136 = vst.msk [vmem:[%s3] sm:$0xf] %vm135, %v131
    %137 = vst.msk [vmem:[%s3 + $0x4] sm:$0xf] %vm135, %v132
  $region21: #{forward.22} parent=0 // pred_fallthru
    _
  // Predicated region
  $region22: #{forward.22} parent=0 // pred_check
    _
  $region23: #{forward.22} parent=0 // pred_check_branch
    %139 = sbr.rel (0) target = $region25
  $region24: #{forward.22} parent=0 // pred_region
    _
  $region25: #{forward.22} parent=0 // pred_fallthru
    _
  // Predicated region
  $region26: #{forward.22} parent=0 // pred_check
    _
  $region27: #{forward.22} parent=0 // pred_check_branch
    %141 = sbr.rel (0) target = $region29
  $region28: #{forward.22} parent=0 // pred_region
    _
  $region29: #{forward.22} parent=0 // pred_fallthru
    _

// kernel: forward.20
$region0: #{forward.20}
  #allocation0 [shape = 'u32[]', space=smem, size = 0x4, offset = 0x4, fixed_abs, tag = 'smem constant byte address 0x4 - core index']
  #allocation1 [shape = 'u32[144,128]{1,0:T(1,128)}', space=vmem, size = 0x12000, scoped, tag = 'internal scratch']
  %s0 = inlined_call_operand.vmem [shape: bf16[16,32], index: 0, kind: input, shape index: {}]
  %s1 = inlined_call_operand.vmem [shape: bf16[16,32], index: 1, kind: input, shape index: {}]
  %s2 = inlined_call_operand.vmem [shape: f32[1,32], index: 2, kind: input, shape index: {}]
  %s3 = inlined_call_operand.vmem [shape: f32[1,32], index: 3, kind: input, shape index: {}]
  %s4 = inlined_call_operand.vmem [shape: bf16[16,32], index: 4, kind: output, shape index: {}]
  %s5 = sld [smem:[#allocation0]]
  $region26: #{forward.20} parent=0
    _
  %s7 = ssub.s32 1, %s5
  %s8 = scalar_select 0, %s7, %s5
  // Predicated region
  $region2: #{forward.20} parent=0 // pred_check
    _
  $region3: #{forward.20} parent=0 // pred_check_branch
    %10 = sbr.rel (0) target = $region5
  $region4: #{forward.20} parent=0 // pred_region
    _
  $region5: #{forward.20} parent=0 // pred_fallthru
    _
  // Predicated region
  $region6: #{forward.20} parent=0 // pred_check
    _
  $region7: #{forward.20} parent=0 // pred_check_branch
    %12 = sbr.rel (0) target = $region9
  $region8: #{forward.20} parent=0 // pred_region
    _
  $region9: #{forward.20} parent=0 // pred_fallthru
    _
  // Predicated region
  $region10: #{forward.20} parent=0 // pred_check
    _
  $region11: #{forward.20} parent=0 // pred_check_branch
    %14 = sbr.rel (0) target = $region13
  $region12: #{forward.20} parent=0 // pred_region
    _
  $region13: #{forward.20} parent=0 // pred_fallthru
    _
  // Predicated region
  $region14: #{forward.20} parent=0 // pred_check
    _
  $region15: #{forward.20} parent=0 // pred_check_branch
    %16 = sbr.rel (0) target = $region17
  $region16: #{forward.20} parent=0 // pred_region
    _
  $region17: #{forward.20} parent=0 // pred_fallthru
    _
  %v17 = vld [vmem:[%s0] sm:$0xf]
  %v18 = vld [vmem:[%s0 + $0x4] sm:$0xf]
  %v19 = vunpack.c.l.bf16 %v17
  %v20 = vunpack.c.l.bf16 %v18
  %v21 = vld [vmem:[%s1] sm:$0xf]
  %v22 = vld [vmem:[%s1 + $0x4] sm:$0xf]
  %v23 = vunpack.c.l.bf16 %v21
  %v24 = vunpack.c.l.bf16 %v22
  %v25 = vadd.f32 %v19, %v23
  %v26 = vadd.f32 %v20, %v24
  %v27 = vld [vmem:[%s2] sm:$0x1]
  %v28 = vld [vmem:[%s3] sm:$0x1]
  %vm29 = vcmask 261120
  %v30 = vsel %vm29, %v25, 0.0
  %31 = vadd.xlane.f32.xlu0 %v30
  %v32 = vpop.xlane.xlu0 %31
  %v33 = vsel %vm29, %v26, 0.0
  %34 = vadd.xlane.f32.xlu0 %v33
  %v35 = vpop.xlane.xlu0 %34
  %v36 = vrcp.pop 32.0
  %v37 = vmul.f32 %v32, %v36
  %v38 = vmul.f32 %v35, %v36
  %v39 = vsub.f32 %v25, %v37
  %v40 = vsub.f32 %v26, %v38
  %v41 = vmul.f32 %v39, %v39
  %v42 = vmul.f32 %v40, %v40
  %v43 = vsel %vm29, %v41, 0.0
  %44 = vadd.xlane.f32.xlu0 %v43
  %v45 = vpop.xlane.xlu0 %44
  %v46 = vsel %vm29, %v42, 0.0
  %47 = vadd.xlane.f32.xlu0 %v46
  %v48 = vpop.xlane.xlu0 %47
  %v49 = vmul.f32 %v45, %v36
  %v50 = vmul.f32 %v48, %v36
  %v51 = vadd.f32 %v49, 1e-12
  %v52 = vadd.f32 %v50, 1e-12
  %v53 = vrsqrt.pop %v51
  %v54 = vrsqrt.pop %v52
  %v55 = vmul.f32 %v39, %v53
  %v56 = vmul.f32 %v40, %v54
  %v58 = vlaneseq
  %v59 = vshrl.u32 %v58, 7
  %v60 = vsub.s32 0, %v59
  %v61 = vrot.slane %v27, %v60
  %v63 = vmul.f32 %v55, %v61
  %v64 = vmul.f32 %v56, %v61
  %v66 = vlaneseq
  %v67 = vshrl.u32 %v66, 7
  %v68 = vsub.s32 0, %v67
  %v69 = vrot.slane %v28, %v68
  %v71 = vadd.f32 %v63, %v69
  %v72 = vadd.f32 %v64, %v69
  %v73 = vpack.c.bf16 %v72, %v71
  %v75 = vunpack.c.l.b16 %v73
  %v76 = vunpack.c.h.b16 %v73
  %v77 = vpack.c.b16 %v75, %v75
  %v78 = vpack.c.b16 %v76, %v76
  %vm81 = vcmask 257024
  %82 = vst.msk [vmem:[%s4] sm:$0xf] %vm81, %v77
  %83 = vst.msk [vmem:[%s4 + $0x4] sm:$0xf] %vm81, %v78
  // Predicated region
  $region18: #{forward.20} parent=0 // pred_check
    _
  $region19: #{forward.20} parent=0 // pred_check_branch
    %85 = sbr.rel (0) target = $region21
  $region20: #{forward.20} parent=0 // pred_region
    _
  $region21: #{forward.20} parent=0 // pred_fallthru
    _
  // Predicated region
  $region22: #{forward.20} parent=0 // pred_check
    _
  $region23: #{forward.20} parent=0 // pred_check_branch
    %87 = sbr.rel (0) target = $region25
  $region24: #{forward.20} parent=0 // pred_region
    _
  $region25: #{forward.20} parent=0 // pred_fallthru
    _

// kernel: forward.31
$region0: #{forward.31}
  #allocation0 [shape = 'u32[]', space=smem, size = 0x4, offset = 0x4, fixed_abs, tag = 'smem constant byte address 0x4 - core index']
  #allocation1 [shape = 'u32[144,128]{1,0:T(1,128)}', space=vmem, size = 0x12000, scoped, tag = 'internal scratch']
  #allocation2 [shape = 'f32[2,32]{1,0:T(2,128)}', space=vmem, size = 0x400, scoped, tag = 'scratch operand']
  %s0 = inlined_call_operand.vmem [shape: bf16[2,8,32], index: 0, kind: input, shape index: {}]
  %s1 = inlined_call_operand.vmem [shape: f32[32,4], index: 1, kind: input, shape index: {}]
  %s2 = inlined_call_operand.vmem [shape: f32[1,4], index: 2, kind: input, shape index: {}]
  %s3 = inlined_call_operand.hbm [shape: f32[2,4], index: 3, kind: output, shape index: {}]
  %s4 = sld [smem:[#allocation0]]
  $region30: #{forward.31} parent=0
    _
  %s6 = ssub.s32 1, %s4
  %s7 = scalar_select 0, %s6, %s4
  $region1: #{forward.31} parent=0
    #allocation3 [shape = 'u8[1024]{0}', space=vmem, size = 0x400, scoped, tag = 'output window, operand 0, single buffered']
    #allocation4 [shape = 's32[1]{0}', space=sflag, size = 0x4, scoped, tag = 'scoped memory for forward.31']
    %8 = vsyncpa [#allocation4], 0
    // Predicated region
    $region2: #{forward.31} parent=1 // pred_check
      _
    $region3: #{forward.31} parent=1 // pred_check_branch
      %10 = sbr.rel (0) target = $region5
    $region4: #{forward.31} parent=1 // pred_region
      _
    $region5: #{forward.31} parent=1 // pred_fallthru
      _
    // Predicated region
    $region6: #{forward.31} parent=1 // pred_check
      _
    $region7: #{forward.31} parent=1 // pred_check_branch
      %12 = sbr.rel (0) target = $region9
    $region8: #{forward.31} parent=1 // pred_region
      _
    $region9: #{forward.31} parent=1 // pred_fallthru
      _
    // Predicated region
    $region10: #{forward.31} parent=1 // pred_check
      _
    $region11: #{forward.31} parent=1 // pred_check_branch
      %14 = sbr.rel (0) target = $region13
    $region12: #{forward.31} parent=1 // pred_region
      _
    $region13: #{forward.31} parent=1 // pred_fallthru
      _
    %p15 = scmp.eq.s32.totalorder 0, 0
    // Predicated region
    $region14: #{forward.31} parent=1 // pred_check
      %p16 = pneg %p15
    $region15: #{forward.31} parent=1 // pred_check_branch
      %18 = sbr.rel (%p16) target = $region17
    $region16: #{forward.31} parent=1 // pred_region
      %vm19 = vcmask 254976
      %20 = vst.msk [vmem:[#allocation2] sm:$0x3] %vm19, -inf
    $region17: #{forward.31} parent=1 // pred_fallthru
      _
    %v21 = vld [vmem:[%s0] sm:$0xf]
    %v22 = vld [vmem:[%s0 + $0x4] sm:$0xf]
    %v23 = vunpack.c.l.bf16 %v21
    %v24 = vunpack.c.l.bf16 %v22
    %v25 = vld [vmem:[#allocation2] sm:$0x3]
    %vm26 = vcmask 261120
    %v27 = vsel %vm26, %v23, -inf
    %v28 = vrot.slane %v27, 4
    %v29 = vmax.f32 %v27, %v28
    %v30 = vrot.slane %v29, 2
    %v31 = vmax.f32 %v29, %v30
    %v32 = vrot.slane %v31, 1
    %v33 = vmax.f32 %v31, %v32
    %v34 = vsel %vm26, %v24, -inf
    %v35 = vrot.slane %v34, 4
    %v36 = vmax.f32 %v34, %v35
    %v37 = vrot.slane %v36, 2
    %v38 = vmax.f32 %v36, %v37
    %v39 = vrot.slane %v38, 1
    %v40 = vmax.f32 %v38, %v39
    %vm43 = vcmask 1041409
    %v44 = vsel %vm43, %v40, %v33
    %v46 = vmax.f32 %v25, %v44
    %vm47 = vcmask 254976
    %48 = vst.msk [vmem:[#allocation2] sm:$0x3] %vm47, %v46
    // Predicated region
    $region18: #{forward.31} parent=1 // pred_check
      %p49 = pneg %p15
    $region19: #{forward.31} parent=1 // pred_check_branch
      %51 = sbr.rel (%p49) target = $region21
    $region20: #{forward.31} parent=1 // pred_region
      %v52 = vld [vmem:[#allocation2] sm:$0x3]
      %v53 = vld [vmem:[%s1] sm:$0xff]
      %v54 = vld [vmem:[%s1 + $0x8] sm:$0xff]
      %v55 = vld [vmem:[%s1 + $0x10] sm:$0xff]
      %v56 = vld [vmem:[%s1 + $0x18] sm:$0xff]
      %v57 = vld [vmem:[%s2] sm:$0x1]
      %v59 = vlaneseq
      %v60 = vshrl.u32 %v59, 7
      %v61 = vsub.s32 0, %v60
      %v62 = vrot.slane %v57, %v61
      %v65 = vsel %vm26, %v52, 0
      %67 = vmatprep.subr.mxu0 0.0
      %68 = vmatpush1.msra.mxu0 %v53
      %69 = vmatprep.subr.mxu0 0.0
      %70 = vmatpush1.msra.mxu0 %v54
      %71 = vmatprep.subr.mxu0 0.0
      %72 = vmatpush1.msra.mxu0 %v55
      %73 = vmatprep.subr.mxu0 0.0
      %74 = vmatpush1.msra.mxu0 %v56
      %75 = vmatprep.subr.mxu0 0.0
      %76 = vmatpush1.msra.mxu0 0.0
      %77 = vmatprep.subr.mxu0 0.0
      %78 = vmatpush1.msra.mxu0 0.0
      %79 = vmatprep.subr.mxu0 0.0
      %80 = vmatpush1.msra.mxu0 0.0
      %81 = vmatprep.subr.mxu0 0.0
      %82 = vmatpush1.msra.mxu0 0.0
      %83 = vmatprep.subr.mxu0 0.0
      %84 = vmatpush1.msra.mxu0 0.0
      %85 = vmatprep.subr.mxu0 0.0
      %86 = vmatpush1.msra.mxu0 0.0
      %87 = vmatprep.subr.mxu0 0.0
      %88 = vmatpush1.msra.mxu0 0.0
      %89 = vmatprep.subr.mxu0 0.0
      %90 = vmatpush1.msra.mxu0 0.0
      %91 = vmatprep.subr.mxu0 0.0
      %92 = vmatpush1.msra.mxu0 0.0
      %93 = vmatprep.subr.mxu0 0.0
      %94 = vmatpush1.msra.mxu0 0.0
      %95 = vmatprep.subr.mxu0 0.0
      %96 = vmatpush1.msra.mxu0 0.0
      %97 = vmatprep.subr.mxu0 0.0
      %98 = vmatpush1.msra.mxu0 0.0
      %99 = vmatprep.subr.mxu0 0.0
      %100 = vmatpush1.msra.mxu0 0.0
      %101 = vmatprep.subr.mxu0 0.0
      %102 = vmatpush1.msra.mxu0 0.0
      %103 = vmatprep.subr.mxu0 0.0
      %104 = vmatpush1.msra.mxu0 0.0
      %105 = vmatprep.subr.mxu0 0.0
      %106 = vmatpush1.msra.mxu0 0.0
      %107 = vmatprep.subr.mxu0 0.0
      %108 = vmatpush1.msra.mxu0 0.0
      %109 = vmatprep.subr.mxu0 0.0
      %110 = vmatpush1.msra.mxu0 0.0
      %111 = vmatprep.subr.mxu0 0.0
      %112 = vmatpush1.msra.mxu0 0.0
      %113 = vmatprep.subr.mxu0 0.0
      %114 = vmatpush1.msra.mxu0 0.0
      %115 = vmatprep.subr.mxu0 0.0
      %116 = vmatpush1.msra.mxu0 0.0
      %117 = vmatprep.subr.mxu0 0.0
      %118 = vmatpush1.msra.mxu0 0.0
      %119 = vmatprep.subr.mxu0 0.0
      %120 = vmatpush1.msra.mxu0 0.0
      %121 = vmatprep.subr.mxu0 0.0
      %122 = vmatpush1.msra.mxu0 0.0
      %123 = vmatprep.subr.mxu0 0.0
      %124 = vmatpush1.msra.mxu0 0.0
      %125 = vmatprep.subr.mxu0 0.0
      %126 = vmatpush1.msra.mxu0 0.0
      %127 = vmatprep.subr.mxu0 0.0
      %128 = vmatpush1.msra.mxu0 0.0
      %129 = vmatprep.subr.mxu0 0.0
      %130 = vmatpush1.msra.mxu0 0.0
      %131 = vmatprep.mubr.f32.mxu0 0.0
      %132 = vmatmul.mubr.f32.gmra.mrb[0].mxu0 %v65
      %v133 = vpop.f32.mrb[0].mxu0
      %v134 = vadd.f32 %v62, %v133
      %v135 = vpop.f32.mrb[0].mxu0
      %136 = vdwg.mxu0
      %vm137 = vcmask 25600
      %v138 = vsel %vm137, %v134, -inf
      %139 = vmax.xlane.f32.xlu0 %v138
      %v140 = vpop.xlane.xlu0 %139
      %v141 = vsub.f32 %v134, %v140
      %v142 = vmul.f32 %v141, 1.442695
      %v143 = vpow.pop %v142
      %v144 = vsel %vm137, %v143, 0.0
      %145 = vadd.xlane.f32.xlu0 %v144
      %v146 = vpop.xlane.xlu0 %145
      %v147 = vrcp.pop %v146
      %v148 = vmul.f32 %v143, %v147
      %149 = vst.msk [vmem:[#allocation3] sm:$0x3] %vm137, %v148
    $region21: #{forward.31} parent=1 // pred_fallthru
      _
    // Predicated region
    $region22: #{forward.31} parent=1 // pred_check
      _
    $region23: #{forward.31} parent=1 // pred_check_branch
      %151 = sbr.rel (0) target = $region25
    $region24: #{forward.31} parent=1 // pred_region
      %s153 = ssub.s32 32, 32
      %154 = vsyncadd [#allocation4], %s153
      %s156 = sshll.u32 [#allocation3], 4
      %s157 = int_to_ptr.vmem [resolvable:$true] %s156
      %159 = dma.vmem_to_hbm [thread:$0]  %s157, 32, %s3, [#allocation4]
    $region25: #{forward.31} parent=1 // pred_fallthru
      _
    // Predicated region
    $region26: #{forward.31} parent=1 // pred_check
      _
    $region27: #{forward.31} parent=1 // pred_check_branch
      %161 = sbr.rel (0) target = $region29
    $region28: #{forward.31} parent=1 // pred_region
      %162 = dma.done [#allocation4], 32
    $region29: #{forward.31} parent=1 // pred_fallthru
      _
    %163 = vsyncpa [#allocation4], 1

</llo_original>
